<compile_context>
chip_gen: v6e
topology: v6e:2x2x1
jax: 0.10.0
libtpu: 0.0.40
codegen_flags: <defaults>
</compile_context>

<pallas_src>
import jax
import jax.numpy as jnp
from jax.experimental import pallas as pl
from jax.experimental.pallas import tpu as pltpu


def _cnn_branch_kernel(x_ref, w1_ref, sh1_ref, w2_ref, sh2_ref, o_ref):
    """One grid step = one whole image (or a half-image row block when batch==1).

    x_ref  : (1, TM, Kpad)       bf16  im2col rows (Kpad = 9*Cin zero-padded to 128)
    w1_ref : (Kpad, C1)          bf16  conv1 weights * BN1 scale (zero rows in pad)
    sh1_ref: (1, C1)             f32   folded conv1 bias + BN1 shift
    w2_ref : (C1, C2)            bf16  conv2 (1x1) weights * BN2 scale
    sh2_ref: (1, C2)             f32   folded conv2 bias + BN2 shift
    o_ref  : (1, ho_t, Wo, C2)   f32   2x2 max-pooled output tile (NHWC, lane-dense)
    """
    ho_t, wo, c2 = o_ref.shape[1], o_ref.shape[2], o_ref.shape[3]

    patch = x_ref[0]                                    # (TM, Kpad) bf16

    # ---- conv1 (3x3, pad=1) as a single im2col matmul (K = Kpad) ----
    h1 = jnp.dot(patch, w1_ref[...], preferred_element_type=jnp.float32)
    h1 = jnp.maximum(h1 + sh1_ref[...], 0.0)            # (TM, C1) f32

    # ---- conv2 (1x1) as a single matmul ----
    h2 = jnp.dot(h1.astype(jnp.bfloat16), w2_ref[...],
                 preferred_element_type=jnp.float32)
    h2 = jnp.maximum(h2 + sh2_ref[...], 0.0)            # (TM, C2) f32

    # ---- 2x2 max pool (stride 2), C2=128 stays lane-dense ----
    # Column pairs = adjacent im2col rows (within-tile sublane pair reduce):
    colmax = jnp.max(h2.reshape(2 * ho_t * wo, 2, c2), axis=1)   # (2*ho_t*Wo, C2)
    # Row pairs = contiguous sublane halves after regrouping:
    t = colmax.reshape(ho_t, 2 * wo, c2)
    pooled = jnp.maximum(t[:, :wo, :], t[:, wo:, :])             # (ho_t, Wo, C2)

    o_ref[0] = pooled.astype(o_ref.dtype)


@jax.jit
def simple_cnn_branch_forward(x_nchw, params):
    """x_nchw: (N, Cin, H, W) f32 -> (N, C2 * H/2 * W/2) f32 (PyTorch view order)."""
    w1, b1, g1, beta1, m1, v1, w2, b2, g2, beta2, m2, v2 = params
    eps = 1e-5

    N, cin, H, W = x_nchw.shape
    c1 = w1.shape[0]   # 256
    c2 = w2.shape[0]   # 128
    assert H % 2 == 0 and W % 2 == 0, "2x2 max-pool assumes even spatial dims"

    # ---- fold BN (eval mode) into conv weights (scale) + per-channel shift ----
    scale1 = g1 / jnp.sqrt(v1 + eps)
    shift1 = (beta1 + scale1 * (b1 - m1)).reshape(1, c1).astype(jnp.float32)
    scale2 = g2 / jnp.sqrt(v2 + eps)
    shift2 = (beta2 + scale2 * (b2 - m2)).reshape(1, c2).astype(jnp.float32)

    # ---- conv weights -> matmul operands, K lane-aligned to 128 ----
    K = 9 * cin
    Kpad = ((K + 127) // 128) * 128          # 36 -> 128: contiguous, unmasked LHS rows

    # conv1 weight (C1, Cin, 3, 3) -> (K, C1); row index = (dy*3+dx)*Cin + c
    w1_k = jnp.transpose(w1, (2, 3, 1, 0)).reshape(K, c1) * scale1
    w1_k = jnp.pad(w1_k, ((0, Kpad - K), (0, 0))).astype(jnp.bfloat16)
    # conv2 weight (C2, C1, 1, 1) -> (C1, C2)
    w2_k = (jnp.transpose(w2[:, :, 0, 0], (1, 0)) * scale2).astype(jnp.bfloat16)

    # ---- wrapper-side im2col: lane-dense (N, H*W, Kpad) bf16 ----
    x_nhwc = jnp.transpose(x_nchw, (0, 2, 3, 1)).astype(jnp.float32)
    x_pad = jnp.pad(x_nhwc, ((0, 0), (1, 1), (1, 1), (0, 0)))
    taps = [x_pad[:, dy:dy + H, dx:dx + W, :] for dy in range(3) for dx in range(3)]
    x_cols = jnp.concatenate(taps, axis=-1).reshape(N, H * W, K)
    x_cols = jnp.pad(x_cols, ((0, 0), (0, 0), (0, Kpad - K))).astype(jnp.bfloat16)

    # One grid step covers a whole image (overhead-bound: fewer, fatter steps).
    # If batch == 1, split rows in two so v7x's two TensorCores both get work.
    row_tiles = 1 if (N >= 2 or H % 4 != 0) else 2
    tile_rows = H // row_tiles
    TM = tile_rows * W
    Ho, Wo = H // 2, W // 2
    ho_t = tile_rows // 2

    out_shape = jax.ShapeDtypeStruct((N, Ho, Wo, c2), jnp.float32)

    if row_tiles == 1:
        grid = (N,)
        in_specs = [
            pl.BlockSpec((1, TM, Kpad), lambda n: (n, 0, 0)),
            pl.BlockSpec((Kpad, c1), lambda n: (0, 0)),
            pl.BlockSpec((1, c1), lambda n: (0, 0)),
            pl.BlockSpec((c1, c2), lambda n: (0, 0)),
            pl.BlockSpec((1, c2), lambda n: (0, 0)),
        ]
        out_spec = pl.BlockSpec((1, ho_t, Wo, c2), lambda n: (n, 0, 0, 0))
        dims = ("parallel",)
    else:
        grid = (N, row_tiles)
        in_specs = [
            pl.BlockSpec((1, TM, Kpad), lambda n, m: (n, m, 0)),
            pl.BlockSpec((Kpad, c1), lambda n, m: (0, 0)),
            pl.BlockSpec((1, c1), lambda n, m: (0, 0)),
            pl.BlockSpec((c1, c2), lambda n, m: (0, 0)),
            pl.BlockSpec((1, c2), lambda n, m: (0, 0)),
        ]
        out_spec = pl.BlockSpec((1, ho_t, Wo, c2), lambda n, m: (n, m, 0, 0))
        dims = ("parallel", "parallel")

    pooled_nhwc = pl.pallas_call(
        _cnn_branch_kernel,
        out_shape=out_shape,
        grid_spec=pltpu.PrefetchScalarGridSpec(
            num_scalar_prefetch=0,
            grid=grid,
            in_specs=in_specs,
            out_specs=out_spec,
        ),
        compiler_params=pltpu.CompilerParams(dimension_semantics=dims),
    )(x_cols, w1_k, shift1, w2_k, shift2)

    # Match PyTorch x.contiguous().view(N, -1): flatten in NCHW (C-major) order.
    # Kept wrapper-side: a direct NCHW kernel output would have last dim Wo<128
    # (masked partial stores); the lane-dense NHWC store + tiny XLA transpose wins.
    pooled_nchw = jnp.transpose(pooled_nhwc, (0, 3, 1, 2))
    return pooled_nchw.reshape(N, c2 * Ho * Wo)


def _reference_forward(x_nchw, params):
    """Pure-XLA reference with the same eval-mode BN semantics (f32 throughout)."""
    w1, b1, g1, beta1, m1, v1, w2, b2, g2, beta2, m2, v2 = params
    eps = 1e-5

    def bn(x, g, beta, m, v):
        return (g[None, :, None, None] * (x - m[None, :, None, None])
                / jnp.sqrt(v + eps)[None, :, None, None] + beta[None, :, None, None])

    x = jax.lax.conv_general_dilated(
        x_nchw, w1, window_strides=(1, 1), padding=((1, 1), (1, 1)),
        dimension_numbers=("NCHW", "OIHW", "NCHW"))
    x = jnp.maximum(bn(x + b1[None, :, None, None], g1, beta1, m1, v1), 0.0)
    x = jax.lax.conv_general_dilated(
        x, w2, window_strides=(1, 1), padding="VALID",
        dimension_numbers=("NCHW", "OIHW", "NCHW"))
    x = jnp.maximum(bn(x + b2[None, :, None, None], g2, beta2, m2, v2), 0.0)
    x = jax.lax.reduce_window(x, -jnp.inf, jax.lax.max,
                              (1, 1, 2, 2), (1, 1, 2, 2), "VALID")
    return x.reshape(x.shape[0], -1)


def init_params(key, hsi_channels):
    """Deterministic parameter init matching the module's shapes."""
    c1, c2 = 256, 128
    ks = jax.random.split(key, 10)
    w1 = 0.05 * jax.random.normal(ks[0], (c1, hsi_channels, 3, 3), jnp.float32)
    b1 = 0.01 * jax.random.normal(ks[1], (c1,), jnp.float32)
    g1 = 1.0 + 0.1 * jax.random.normal(ks[2], (c1,), jnp.float32)
    beta1 = 0.1 * jax.random.normal(ks[3], (c1,), jnp.float32)
    m1 = 0.05 * jax.random.normal(ks[4], (c1,), jnp.float32)
    v1 = 1.0 + 0.1 * jnp.abs(jax.random.normal(ks[5], (c1,), jnp.float32))

    w2 = 0.05 * jax.random.normal(ks[6], (c2, c1, 1, 1), jnp.float32)
    b2 = 0.01 * jax.random.normal(ks[7], (c2,), jnp.float32)
    g2 = 1.0 + 0.1 * jax.random.normal(ks[8], (c2,), jnp.float32)
    beta2 = 0.1 * jax.random.normal(ks[9], (c2,), jnp.float32)
    m2 = jnp.zeros((c2,), jnp.float32)
    v2 = jnp.ones((c2,), jnp.float32)

    return (w1, b1, g1, beta1, m1, v1, w2, b2, g2, beta2, m2, v2)


if __name__ == "__main__":
    key = jax.random.PRNGKey(0)
    k_x, k_p = jax.random.split(key)

    N, hsi_channels, H, W = 2, 4, 16, 16
    x = jax.random.normal(k_x, (N, hsi_channels, H, W), jnp.float32)  # NCHW, like PyTorch
    params = init_params(k_p, hsi_channels)

    out = simple_cnn_branch_forward(x, params)
    jax.block_until_ready(out)
    assert out.shape == (N, 128 * (H // 2) * (W // 2)), out.shape

    # Loose tolerance: kernel uses bf16 operands with f32 accumulation.
    ref = _reference_forward(x, params)
    max_err = float(jnp.max(jnp.abs(out - ref)))
    assert jnp.allclose(out, ref, rtol=5e-2, atol=3e-2), f"max_abs_err={max_err}"

    print("KERNEL_OK")
</pallas_src>

<mosaic_0001>
module attributes {stable_mosaic.version = 11 : i64} {
  func.func @_cnn_branch_kernel(%arg0: i32, %arg1: memref<1x256x128xbf16, #tpu.memory_space<vmem>>, %arg2: memref<128x256xbf16, #tpu.memory_space<vmem>>, %arg3: memref<1x256xf32, #tpu.memory_space<vmem>>, %arg4: memref<256x128xbf16, #tpu.memory_space<vmem>>, %arg5: memref<1x128xf32, #tpu.memory_space<vmem>>, %arg6: memref<1x8x8x128xf32, #tpu.memory_space<vmem>>) attributes {dimension_semantics = [#tpu.dimension_semantics<parallel>], iteration_bounds = array<i64: 2>, scalar_prefetch = 0 : i64, scratch_operands = 0 : i64, tpu.core_type = #tpu.core_type<tc>, window_params = [{transform_indices = @transform_0, window_bounds = array<i64: 1, 256, 128>}, {pipeline_mode = #tpu.pipeline_mode<synchronous>, transform_indices = @transform_1, window_bounds = array<i64: 128, 256>}, {pipeline_mode = #tpu.pipeline_mode<synchronous>, transform_indices = @transform_2, window_bounds = array<i64: 1, 256>}, {pipeline_mode = #tpu.pipeline_mode<synchronous>, transform_indices = @transform_3, window_bounds = array<i64: 256, 128>}, {pipeline_mode = #tpu.pipeline_mode<synchronous>, transform_indices = @transform_4, window_bounds = array<i64: 1, 128>}, {transform_indices = @transform_5, window_bounds = array<i64: 1, 8, 8, 128>}]} {
    %c0 = arith.constant 0 : index
    %c0_0 = arith.constant 0 : index
    %c0_1 = arith.constant 0 : index
    %0 = vector.load %arg1[%c0, %c0_0, %c0_1] : memref<1x256x128xbf16, #tpu.memory_space<vmem>>, vector<1x256x128xbf16>
    %1 = vector.shape_cast %0 : vector<1x256x128xbf16> to vector<256x128xbf16>
    %c0_2 = arith.constant 0 : index
    %c0_3 = arith.constant 0 : index
    %2 = vector.load %arg2[%c0_2, %c0_3] : memref<128x256xbf16, #tpu.memory_space<vmem>>, vector<128x256xbf16>
    %cst = arith.constant dense<0.000000e+00> : vector<256x256xf32>
    %3 = tpu.matmul %1, %2, %cst {dimension_numbers = #tpu.dot_dimension_numbers<[1], [0], [0], [1], [0, 0, 1, 1], [], []>} : vector<256x128xbf16>, vector<128x256xbf16>, vector<256x256xf32> -> vector<256x256xf32>
    %c0_4 = arith.constant 0 : index
    %c0_5 = arith.constant 0 : index
    %4 = vector.load %arg3[%c0_4, %c0_5] : memref<1x256xf32, #tpu.memory_space<vmem>>, vector<1x256xf32>
    %5 = vector.broadcast %4 : vector<1x256xf32> to vector<256x256xf32>
    %6 = arith.addf %3, %5 : vector<256x256xf32>
    %cst_6 = arith.constant 0.000000e+00 : f32
    %7 = vector.broadcast %cst_6 : f32 to vector<256x256xf32>
    %8 = arith.maximumf %6, %7 : vector<256x256xf32>
    %9 = arith.truncf %8 : vector<256x256xf32> to vector<256x256xbf16>
    %c0_7 = arith.constant 0 : index
    %c0_8 = arith.constant 0 : index
    %10 = vector.load %arg4[%c0_7, %c0_8] : memref<256x128xbf16, #tpu.memory_space<vmem>>, vector<256x128xbf16>
    %cst_9 = arith.constant dense<0.000000e+00> : vector<256x128xf32>
    %11 = tpu.matmul %9, %10, %cst_9 {dimension_numbers = #tpu.dot_dimension_numbers<[1], [0], [0], [1], [0, 0, 1, 1], [], []>} : vector<256x256xbf16>, vector<256x128xbf16>, vector<256x128xf32> -> vector<256x128xf32>
    %c0_10 = arith.constant 0 : index
    %c0_11 = arith.constant 0 : index
    %12 = vector.load %arg5[%c0_10, %c0_11] : memref<1x128xf32, #tpu.memory_space<vmem>>, vector<1x128xf32>
    %13 = vector.broadcast %12 : vector<1x128xf32> to vector<256x128xf32>
    %14 = arith.addf %11, %13 : vector<256x128xf32>
    %cst_12 = arith.constant 0.000000e+00 : f32
    %15 = vector.broadcast %cst_12 : f32 to vector<256x128xf32>
    %16 = arith.maximumf %14, %15 : vector<256x128xf32>
    %17 = vector.shape_cast %16 : vector<256x128xf32> to vector<128x2x128xf32>
    %cst_13 = arith.constant dense<0xFF800000> : vector<128x128xf32>
    %18 = vector.multi_reduction <maximumf>, %17, %cst_13 [1] : vector<128x2x128xf32> to vector<128x128xf32>
    %19 = vector.shape_cast %18 : vector<128x128xf32> to vector<8x16x128xf32>
    %20 = vector.extract_strided_slice %19 {offsets = [0, 0, 0], sizes = [8, 8, 128], strides = [1, 1, 1]} : vector<8x16x128xf32> to vector<8x8x128xf32>
    %21 = vector.extract_strided_slice %19 {offsets = [0, 8, 0], sizes = [8, 8, 128], strides = [1, 1, 1]} : vector<8x16x128xf32> to vector<8x8x128xf32>
    %22 = arith.maximumf %20, %21 : vector<8x8x128xf32>
    %c0_14 = arith.constant 0 : index
    %c0_15 = arith.constant 0 : index
    %c0_16 = arith.constant 0 : index
    %c0_17 = arith.constant 0 : index
    %23 = vector.load %arg6[%c0_14, %c0_15, %c0_16, %c0_17] : memref<1x8x8x128xf32, #tpu.memory_space<vmem>>, vector<1x8x8x128xf32>
    %24 = vector.shape_cast %23 : vector<1x8x8x128xf32> to vector<8x8x128xf32>
    %25 = vector.shape_cast %22 : vector<8x8x128xf32> to vector<1x8x8x128xf32>
    tpu.vector_store %arg6[%c0_14, %c0_15, %c0_16, %c0_17], %25 {strides = array<i32>} : memref<1x8x8x128xf32, #tpu.memory_space<vmem>>, vector<1x8x8x128xf32>,
    return
  }
  func.func @transform_0(%arg0: i32) -> (i32, i32, i32) {
    %c0_i32 = arith.constant 0 : i32
    %c0_i32_0 = arith.constant 0 : i32
    %c0_i32_1 = arith.constant 0 : i32
    return %arg0, %c0_i32, %c0_i32_0 : i32, i32, i32
  }
  func.func @transform_1(%arg0: i32) -> (i32, i32) {
    %c0_i32 = arith.constant 0 : i32
    %c0_i32_0 = arith.constant 0 : i32
    %c0_i32_1 = arith.constant 0 : i32
    return %c0_i32, %c0_i32_0 : i32, i32
  }
  func.func @transform_2(%arg0: i32) -> (i32, i32) {
    %c0_i32 = arith.constant 0 : i32
    %c0_i32_0 = arith.constant 0 : i32
    %c0_i32_1 = arith.constant 0 : i32
    return %c0_i32, %c0_i32_0 : i32, i32
  }
  func.func @transform_3(%arg0: i32) -> (i32, i32) {
    %c0_i32 = arith.constant 0 : i32
    %c0_i32_0 = arith.constant 0 : i32
    %c0_i32_1 = arith.constant 0 : i32
    return %c0_i32, %c0_i32_0 : i32, i32
  }
  func.func @transform_4(%arg0: i32) -> (i32, i32) {
    %c0_i32 = arith.constant 0 : i32
    %c0_i32_0 = arith.constant 0 : i32
    %c0_i32_1 = arith.constant 0 : i32
    return %c0_i32, %c0_i32_0 : i32, i32
  }
  func.func @transform_5(%arg0: i32) -> (i32, i32, i32, i32) {
    %c0_i32 = arith.constant 0 : i32
    %c0_i32_0 = arith.constant 0 : i32
    %c0_i32_1 = arith.constant 0 : i32
    %c0_i32_2 = arith.constant 0 : i32
    return %arg0, %c0_i32, %c0_i32_0, %c0_i32_1 : i32, i32, i32, i32
  }
}

</mosaic_0001>

<llo_original>
// kernel: simple_cnn_branch_forward.1
$region0: #{simple_cnn_branch_forward.1}
  #allocation0 [shape = 'u32[]', space=smem, size = 0x4, offset = 0x4, fixed_abs, tag = 'smem constant byte address 0x4 - core index']
  #allocation1 [shape = 'u32[144,128]{1,0:T(1,128)}', space=vmem, size = 0x12000, scoped, tag = 'internal scratch']
  %s0 = inlined_call_operand.vmem [shape: bf16[2,256,128], index: 0, kind: input, shape index: {}]
  %s1 = inlined_call_operand.vmem [shape: bf16[128,256], index: 1, kind: input, shape index: {}]
  %s2 = inlined_call_operand.vmem [shape: f32[1,256], index: 2, kind: input, shape index: {}]
  %s3 = inlined_call_operand.vmem [shape: bf16[256,128], index: 3, kind: input, shape index: {}]
  %s4 = inlined_call_operand.vmem [shape: f32[1,128], index: 4, kind: input, shape index: {}]
  %s5 = inlined_call_operand.vmem [shape: f32[2,8,8,128], index: 5, kind: output, shape index: {}]
  %s6 = sld [smem:[#allocation0]]
  $region53: #{simple_cnn_branch_forward.1} parent=0
    _
  %s8 = ssub.s32 1, %s6
  %s9 = scalar_select 0, %s8, %s6
  loop: start=0, step=1, limit=4
  $region2: #{simple_cnn_branch_forward.1} parent=0 // loop_pre_header
    _
  $region3: #{simple_cnn_branch_forward.1} parent=0 // loop_header
    %s11 = sphi 0, %s15
    %p12 = scmp.ge.s32.totalorder %s11, 4
    %s21 = sphi 0, %s23
    %s24 = sphi 0, %s21
    %s25 = sphi 0, %s24
    %s41 = sphi 0, %s25
    %s45 = sphi 0, %s45
    %s47 = sphi 0, %s45
    %s48 = sphi 0, %s47
    %s62 = sphi 0, %s48
    %s66 = sphi 0, %s66
    %s68 = sphi 0, %s66
    %s69 = sphi 0, %s68
    %s83 = sphi 0, %s69
    %s87 = sphi 0, %s87
    %s89 = sphi 0, %s87
    %s90 = sphi 0, %s89
    %s104 = sphi 0, %s90
    %s108 = sphi 0, %s108
    %s110 = sphi 0, %s108
    %s111 = sphi 0, %s110
    %s125 = sphi 0, %s111
    %s131 = sphi 0, %s133
    %s134 = sphi 0, %s131
    %s135 = sphi 0, %s134
    %s151 = sphi 0, %s135
  $region4: #{simple_cnn_branch_forward.1} parent=0 // loop_header_branch
    %14 = sbr.rel (%p12) target = $region8
  $region5: #{simple_cnn_branch_forward.1} parent=0 // loop_body
    %s16 = ssub.s32 %s11, 1
    %s17 = ssub.s32 %s11, 2
    %s18 = sadd.s32 %s11, 1
    %s19 = ssub.s32 %s11, %s18
    %p20 = scmp.eq.s32.totalorder %s19, 0
    %s22 = sadd.s32 %s21, 1
    %s23 = scalar_select %p20, %s21, %s22
    %p26 = pneg %p20
    %p27 = scmp.eq.s32.totalorder %s11, 1
    %p28 = por %p26, %p27
    %p29 = scmp.ne.s32.totalorder %s21, %s24
    %p30 = scmp.eq.s32.totalorder %s11, 0
    %p31 = por %p29, %p30
    %p32 = scmp.ne.s32.totalorder %s21, %s24
    %p33 = scmp.eq.s32.totalorder %s16, 1
    %p34 = por %p32, %p33
    %p35 = scmp.ne.s32.totalorder %s24, %s25
    %p36 = scmp.eq.s32.totalorder %s16, 0
    %p37 = por %p35, %p36
    %p38 = scmp.ne.s32.totalorder %s24, %s25
    %p39 = scmp.eq.s32.totalorder %s17, 1
    %p40 = por %p38, %p39
    %p42 = scmp.ne.s32.totalorder %s25, %s41
    %p43 = scmp.eq.s32.totalorder %s17, 0
    %p44 = por %p42, %p43
    %s46 = sadd.s32 %s45, 1
    %p49 = scmp.eq.s32.totalorder %s11, 1
    %p50 = scmp.ne.s32.totalorder %s45, %s47
    %p51 = scmp.eq.s32.totalorder %s11, 0
    %p52 = por %p50, %p51
    %p53 = scmp.ne.s32.totalorder %s45, %s47
    %p54 = scmp.eq.s32.totalorder %s16, 1
    %p55 = por %p53, %p54
    %p56 = scmp.ne.s32.totalorder %s47, %s48
    %p57 = scmp.eq.s32.totalorder %s16, 0
    %p58 = por %p56, %p57
    %p59 = scmp.ne.s32.totalorder %s47, %s48
    %p60 = scmp.eq.s32.totalorder %s17, 1
    %p61 = por %p59, %p60
    %p63 = scmp.ne.s32.totalorder %s48, %s62
    %p64 = scmp.eq.s32.totalorder %s17, 0
    %p65 = por %p63, %p64
    %s67 = sadd.s32 %s66, 1
    %p70 = scmp.eq.s32.totalorder %s11, 1
    %p71 = scmp.ne.s32.totalorder %s66, %s68
    %p72 = scmp.eq.s32.totalorder %s11, 0
    %p73 = por %p71, %p72
    %p74 = scmp.ne.s32.totalorder %s66, %s68
    %p75 = scmp.eq.s32.totalorder %s16, 1
    %p76 = por %p74, %p75
    %p77 = scmp.ne.s32.totalorder %s68, %s69
    %p78 = scmp.eq.s32.totalorder %s16, 0
    %p79 = por %p77, %p78
    %p80 = scmp.ne.s32.totalorder %s68, %s69
    %p81 = scmp.eq.s32.totalorder %s17, 1
    %p82 = por %p80, %p81
    %p84 = scmp.ne.s32.totalorder %s69, %s83
    %p85 = scmp.eq.s32.totalorder %s17, 0
    %p86 = por %p84, %p85
    %s88 = sadd.s32 %s87, 1
    %p91 = scmp.eq.s32.totalorder %s11, 1
    %p92 = scmp.ne.s32.totalorder %s87, %s89
    %p93 = scmp.eq.s32.totalorder %s11, 0
    %p94 = por %p92, %p93
    %p95 = scmp.ne.s32.totalorder %s87, %s89
    %p96 = scmp.eq.s32.totalorder %s16, 1
    %p97 = por %p95, %p96
    %p98 = scmp.ne.s32.totalorder %s89, %s90
    %p99 = scmp.eq.s32.totalorder %s16, 0
    %p100 = por %p98, %p99
    %p101 = scmp.ne.s32.totalorder %s89, %s90
    %p102 = scmp.eq.s32.totalorder %s17, 1
    %p103 = por %p101, %p102
    %p105 = scmp.ne.s32.totalorder %s90, %s104
    %p106 = scmp.eq.s32.totalorder %s17, 0
    %p107 = por %p105, %p106
    %s109 = sadd.s32 %s108, 1
    %p112 = scmp.eq.s32.totalorder %s11, 1
    %p113 = scmp.ne.s32.totalorder %s108, %s110
    %p114 = scmp.eq.s32.totalorder %s11, 0
    %p115 = por %p113, %p114
    %p116 = scmp.ne.s32.totalorder %s108, %s110
    %p117 = scmp.eq.s32.totalorder %s16, 1
    %p118 = por %p116, %p117
    %p119 = scmp.ne.s32.totalorder %s110, %s111
    %p120 = scmp.eq.s32.totalorder %s16, 0
    %p121 = por %p119, %p120
    %p122 = scmp.ne.s32.totalorder %s110, %s111
    %p123 = scmp.eq.s32.totalorder %s17, 1
    %p124 = por %p122, %p123
    %p126 = scmp.ne.s32.totalorder %s111, %s125
    %p127 = scmp.eq.s32.totalorder %s17, 0
    %p128 = por %p126, %p127
    %s129 = ssub.s32 %s11, %s18
    %p130 = scmp.eq.s32.totalorder %s129, 0
    %s132 = sadd.s32 %s131, 1
    %s133 = scalar_select %p130, %s131, %s132
    %p136 = pneg %p130
    %p137 = scmp.eq.s32.totalorder %s11, 1
    %p138 = por %p136, %p137
    %p139 = scmp.ne.s32.totalorder %s131, %s134
    %p140 = scmp.eq.s32.totalorder %s11, 0
    %p141 = por %p139, %p140
    %p142 = scmp.ne.s32.totalorder %s131, %s134
    %p143 = scmp.eq.s32.totalorder %s16, 1
    %p144 = por %p142, %p143
    %p145 = scmp.ne.s32.totalorder %s134, %s135
    %p146 = scmp.eq.s32.totalorder %s16, 0
    %p147 = por %p145, %p146
    %p148 = scmp.ne.s32.totalorder %s134, %s135
    %p149 = scmp.eq.s32.totalorder %s17, 1
    %p150 = por %p148, %p149
    %p152 = scmp.ne.s32.totalorder %s135, %s151
    %p153 = scmp.eq.s32.totalorder %s17, 0
    %p154 = por %p152, %p153
    %p155 = scmp.le.s32.totalorder 1, %s11
    %p156 = scmp.lt.s32.totalorder %s11, 3
    %p157 = pnand %p155, %p156
    %p158 = pneg %p157
    // Predicated region
    $region9: #{simple_cnn_branch_forward.1} parent=5 // pred_check
      _
    $region10: #{simple_cnn_branch_forward.1} parent=5 // pred_check_branch
      %160 = sbr.rel (%p157) target = $region12
    $region11: #{simple_cnn_branch_forward.1} parent=5 // pred_region
      %s161 = ssub.s32 %s11, 1
      // Predicated region
      $region13: #{simple_cnn_branch_forward.1} parent=11 // pred_check
        %p162 = pneg %p58
      $region14: #{simple_cnn_branch_forward.1} parent=11 // pred_check_branch
        %164 = sbr.rel (%p162) target = $region16
      $region15: #{simple_cnn_branch_forward.1} parent=11 // pred_region
        _
      $region16: #{simple_cnn_branch_forward.1} parent=11 // pred_fallthru
        _
      // Predicated region
      $region17: #{simple_cnn_branch_forward.1} parent=11 // pred_check
        %p165 = pneg %p79
      $region18: #{simple_cnn_branch_forward.1} parent=11 // pred_check_branch
        %167 = sbr.rel (%p165) target = $region20
      $region19: #{simple_cnn_branch_forward.1} parent=11 // pred_region
        _
      $region20: #{simple_cnn_branch_forward.1} parent=11 // pred_fallthru
        _
      // Predicated region
      $region21: #{simple_cnn_branch_forward.1} parent=11 // pred_check
        %p168 = pneg %p100
      $region22: #{simple_cnn_branch_forward.1} parent=11 // pred_check_branch
        %170 = sbr.rel (%p168) target = $region24
      $region23: #{simple_cnn_branch_forward.1} parent=11 // pred_region
        _
      $region24: #{simple_cnn_branch_forward.1} parent=11 // pred_fallthru
        _
      // Predicated region
      $region25: #{simple_cnn_branch_forward.1} parent=11 // pred_check
        %p171 = pneg %p121
      $region26: #{simple_cnn_branch_forward.1} parent=11 // pred_check_branch
        %173 = sbr.rel (%p171) target = $region28
      $region27: #{simple_cnn_branch_forward.1} parent=11 // pred_region
        _
      $region28: #{simple_cnn_branch_forward.1} parent=11 // pred_fallthru
        _
    $region12: #{simple_cnn_branch_forward.1} parent=5 // pred_fallthru
      _
    %p174 = scmp.lt.s32.totalorder %s11, 2
    // Predicated region
    $region29: #{simple_cnn_branch_forward.1} parent=5 // pred_check
      %p175 = pneg %p174
    $region30: #{simple_cnn_branch_forward.1} parent=5 // pred_check_branch
      %177 = sbr.rel (%p175) target = $region32
    $region31: #{simple_cnn_branch_forward.1} parent=5 // pred_region
      // Predicated region
      $region33: #{simple_cnn_branch_forward.1} parent=31 // pred_check
        %p178 = pneg %p31
      $region34: #{simple_cnn_branch_forward.1} parent=31 // pred_check_branch
        %180 = sbr.rel (%p178) target = $region36
      $region35: #{simple_cnn_branch_forward.1} parent=31 // pred_region
        %p181 = scmp.lt.s32.totalorder %s11, 1
        %s182 = scalar_select %p181, %s11, 1
        %s183 = smul.addr %s182, 32
        %s184 = smul.addr %s183, 4
        %s185 = scalar_lea.vmem %s0, %s184
      $region36: #{simple_cnn_branch_forward.1} parent=31 // pred_fallthru
        _
    $region32: #{simple_cnn_branch_forward.1} parent=5 // pred_fallthru
      _
    %p186 = scmp.le.s32.totalorder 1, %s11
    %p187 = scmp.lt.s32.totalorder %s11, 3
    %p188 = pnand %p186, %p187
    %p189 = pneg %p188
    // Predicated region
    $region37: #{simple_cnn_branch_forward.1} parent=5 // pred_check
      _
    $region38: #{simple_cnn_branch_forward.1} parent=5 // pred_check_branch
      %191 = sbr.rel (%p188) target = $region40
    $region39: #{simple_cnn_branch_forward.1} parent=5 // pred_region
      %s192 = ssub.s32 %s11, 1
      %p193 = scmp.lt.s32.totalorder %s16, 1
      %s194 = scalar_select %p193, %s16, 1
      %s195 = smul.addr %s194, 32
      %s196 = smul.addr %s195, 4
      %s197 = scalar_lea.vmem %s0, %s196
      %p198 = pneg %p37
      %p199 = pneg %p34
      %p200 = pneg %p58
      %p201 = pneg %p55
      %p202 = pneg %p79
      %p203 = pneg %p76
      %p204 = pneg %p100
      %p205 = pneg %p97
      %p206 = pneg %p121
      %p207 = pneg %p118
      %p208 = pneg %p147
      %p209 = pneg %p144
      %p210 = scmp.lt.s32.totalorder %s16, 1
      %s211 = scalar_select %p210, %s16, 1
      %s212 = smul.addr %s211, 8
      %s213 = smul.addr %s212, 8
      %s214 = scalar_lea.vmem %s5, %s213
      %p215 = scmp.lt.s32.totalorder %s16, 1
      %s216 = scalar_select %p215, %s16, 1
      %s217 = smul.addr %s216, 32
      %s218 = smul.addr %s217, 4
      %s219 = scalar_lea.vmem %s0, %s218
      %p220 = scmp.lt.s32.totalorder %s16, 1
      %s221 = scalar_select %p220, %s16, 1
      %s222 = smul.addr %s221, 8
      %s223 = smul.addr %s222, 8
      %s224 = scalar_lea.vmem %s5, %s223
      %v226 = vld [vmem:[%s219] sm:$0xf]
      %v227 = vld [vmem:[%s219 + $0x4] sm:$0xf]
      %v228 = vld [vmem:[%s219 + $0x8] sm:$0xf]
      %v229 = vld [vmem:[%s219 + $0xc] sm:$0xf]
      %v230 = vld [vmem:[%s219 + $0x10] sm:$0xf]
      %v231 = vld [vmem:[%s219 + $0x14] sm:$0xf]
      %v232 = vld [vmem:[%s219 + $0x18] sm:$0xf]
      %v233 = vld [vmem:[%s219 + $0x1c] sm:$0xf]
      %v234 = vld [vmem:[%s219 + $0x20] sm:$0xf]
      %v235 = vld [vmem:[%s219 + $0x24] sm:$0xf]
      %v236 = vld [vmem:[%s219 + $0x28] sm:$0xf]
      %v237 = vld [vmem:[%s219 + $0x2c] sm:$0xf]
      %v238 = vld [vmem:[%s219 + $0x30] sm:$0xf]
      %v239 = vld [vmem:[%s219 + $0x34] sm:$0xf]
      %v240 = vld [vmem:[%s219 + $0x38] sm:$0xf]
      %v241 = vld [vmem:[%s219 + $0x3c] sm:$0xf]
      %v242 = vld [vmem:[%s219 + $0x40] sm:$0xf]
      %v243 = vld [vmem:[%s219 + $0x44] sm:$0xf]
      %v244 = vld [vmem:[%s219 + $0x48] sm:$0xf]
      %v245 = vld [vmem:[%s219 + $0x4c] sm:$0xf]
      %v246 = vld [vmem:[%s219 + $0x50] sm:$0xf]
      %v247 = vld [vmem:[%s219 + $0x54] sm:$0xf]
      %v248 = vld [vmem:[%s219 + $0x58] sm:$0xf]
      %v249 = vld [vmem:[%s219 + $0x5c] sm:$0xf]
      %v250 = vld [vmem:[%s219 + $0x60] sm:$0xf]
      %v251 = vld [vmem:[%s219 + $0x64] sm:$0xf]
      %v252 = vld [vmem:[%s219 + $0x68] sm:$0xf]
      %v253 = vld [vmem:[%s219 + $0x6c] sm:$0xf]
      %v254 = vld [vmem:[%s219 + $0x70] sm:$0xf]
      %v255 = vld [vmem:[%s219 + $0x74] sm:$0xf]
      %v256 = vld [vmem:[%s219 + $0x78] sm:$0xf]
      %v257 = vld [vmem:[%s219 + $0x7c] sm:$0xf]
      %v258 = vld [vmem:[%s1] sm:$0xff]
      %v259 = vld [vmem:[%s1 + $0x8] sm:$0xff]
      %v260 = vld [vmem:[%s1 + $0x10] sm:$0xff]
      %v261 = vld [vmem:[%s1 + $0x18] sm:$0xff]
      %v262 = vld [vmem:[%s1 + $0x20] sm:$0xff]
      %v263 = vld [vmem:[%s1 + $0x28] sm:$0xff]
      %v264 = vld [vmem:[%s1 + $0x30] sm:$0xff]
      %v265 = vld [vmem:[%s1 + $0x38] sm:$0xff]
      %v266 = vld [vmem:[%s1 + $0x40] sm:$0xff]
      %v267 = vld [vmem:[%s1 + $0x48] sm:$0xff]
      %v268 = vld [vmem:[%s1 + $0x50] sm:$0xff]
      %v269 = vld [vmem:[%s1 + $0x58] sm:$0xff]
      %v270 = vld [vmem:[%s1 + $0x60] sm:$0xff]
      %v271 = vld [vmem:[%s1 + $0x68] sm:$0xff]
      %v272 = vld [vmem:[%s1 + $0x70] sm:$0xff]
      %v273 = vld [vmem:[%s1 + $0x78] sm:$0xff]
      %v274 = vld [vmem:[%s2] sm:$0x3]
      %v276 = vlaneseq
      %v277 = vshrl.u32 %v276, 7
      %v278 = vsub.s32 0, %v277
      %v279 = vrot.slane %v274, %v278
      %v280 = vlaneseq
      %v281 = vshrl.u32 %v280, 7
      %v282 = vsub.s32 1, %v281
      %v283 = vrot.slane %v274, %v282
      %v318 = vunpack.c.l.b16 %v226
      %v319 = vunpack.c.l.b16 %v227
      %v320 = vunpack.c.l.b16 %v228
      %v321 = vunpack.c.l.b16 %v229
      %v322 = vunpack.c.l.b16 %v230
      %v323 = vunpack.c.l.b16 %v231
      %v324 = vunpack.c.l.b16 %v232
      %v325 = vunpack.c.l.b16 %v233
      %v326 = vunpack.c.l.b16 %v234
      %v327 = vunpack.c.l.b16 %v235
      %v328 = vunpack.c.l.b16 %v236
      %v329 = vunpack.c.l.b16 %v237
      %v330 = vunpack.c.l.b16 %v238
      %v331 = vunpack.c.l.b16 %v239
      %v332 = vunpack.c.l.b16 %v240
      %v333 = vunpack.c.l.b16 %v241
      %v334 = vunpack.c.l.b16 %v242
      %v335 = vunpack.c.l.b16 %v243
      %v336 = vunpack.c.l.b16 %v244
      %v337 = vunpack.c.l.b16 %v245
      %v338 = vunpack.c.l.b16 %v246
      %v339 = vunpack.c.l.b16 %v247
      %v340 = vunpack.c.l.b16 %v248
      %v341 = vunpack.c.l.b16 %v249
      %v342 = vunpack.c.l.b16 %v250
      %v343 = vunpack.c.l.b16 %v251
      %v344 = vunpack.c.l.b16 %v252
      %v345 = vunpack.c.l.b16 %v253
      %v346 = vunpack.c.l.b16 %v254
      %v347 = vunpack.c.l.b16 %v255
      %v348 = vunpack.c.l.b16 %v256
      %v349 = vunpack.c.l.b16 %v257
      %v350 = vpack.c.b16 %v319, %v318
      %v351 = vpack.c.b16 %v321, %v320
      %v352 = vpack.c.b16 %v323, %v322
      %v353 = vpack.c.b16 %v325, %v324
      %v354 = vpack.c.b16 %v327, %v326
      %v355 = vpack.c.b16 %v329, %v328
      %v356 = vpack.c.b16 %v331, %v330
      %v357 = vpack.c.b16 %v333, %v332
      %v358 = vpack.c.b16 %v335, %v334
      %v359 = vpack.c.b16 %v337, %v336
      %v360 = vpack.c.b16 %v339, %v338
      %v361 = vpack.c.b16 %v341, %v340
      %v362 = vpack.c.b16 %v343, %v342
      %v363 = vpack.c.b16 %v345, %v344
      %v364 = vpack.c.b16 %v347, %v346
      %v365 = vpack.c.b16 %v349, %v348
      %v398 = vunpack.c.l.b16 %v258
      %v399 = vunpack.c.h.b16 %v258
      %v400 = vunpack.c.l.b16 %v259
      %v401 = vunpack.c.h.b16 %v259
      %v402 = vunpack.c.l.b16 %v260
      %v403 = vunpack.c.h.b16 %v260
      %v404 = vunpack.c.l.b16 %v261
      %v405 = vunpack.c.h.b16 %v261
      %v406 = vunpack.c.l.b16 %v262
      %v407 = vunpack.c.h.b16 %v262
      %v408 = vunpack.c.l.b16 %v263
      %v409 = vunpack.c.h.b16 %v263
      %v410 = vunpack.c.l.b16 %v264
      %v411 = vunpack.c.h.b16 %v264
      %v412 = vunpack.c.l.b16 %v265
      %v413 = vunpack.c.h.b16 %v265
      %v414 = vunpack.c.l.b16 %v266
      %v415 = vunpack.c.h.b16 %v266
      %v416 = vunpack.c.l.b16 %v267
      %v417 = vunpack.c.h.b16 %v267
      %v418 = vunpack.c.l.b16 %v268
      %v419 = vunpack.c.h.b16 %v268
      %v420 = vunpack.c.l.b16 %v269
      %v421 = vunpack.c.h.b16 %v269
      %v422 = vunpack.c.l.b16 %v270
      %v423 = vunpack.c.h.b16 %v270
      %v424 = vunpack.c.l.b16 %v271
      %v425 = vunpack.c.h.b16 %v271
      %v426 = vunpack.c.l.b16 %v272
      %v427 = vunpack.c.h.b16 %v272
      %v428 = vunpack.c.l.b16 %v273
      %v429 = vunpack.c.h.b16 %v273
      %v430 = vpack.c.b16 %v400, %v398
      %v431 = vpack.c.b16 %v401, %v399
      %v432 = vpack.c.b16 %v404, %v402
      %v433 = vpack.c.b16 %v405, %v403
      %v434 = vpack.c.b16 %v408, %v406
      %v435 = vpack.c.b16 %v409, %v407
      %v436 = vpack.c.b16 %v412, %v410
      %v437 = vpack.c.b16 %v413, %v411
      %v438 = vpack.c.b16 %v416, %v414
      %v439 = vpack.c.b16 %v417, %v415
      %v440 = vpack.c.b16 %v420, %v418
      %v441 = vpack.c.b16 %v421, %v419
      %v442 = vpack.c.b16 %v424, %v422
      %v443 = vpack.c.b16 %v425, %v423
      %v444 = vpack.c.b16 %v428, %v426
      %v445 = vpack.c.b16 %v429, %v427
      %462 = vmatprep.subr.bf16.mxu0 %v445
      %463 = vmatpush1.bf16.msra.mxu0 %v444
      %464 = vmatprep.subr.bf16.mxu0 %v443
      %465 = vmatpush1.bf16.msra.mxu0 %v442
      %466 = vmatprep.subr.bf16.mxu0 %v441
      %467 = vmatpush1.bf16.msra.mxu0 %v440
      %468 = vmatprep.subr.bf16.mxu0 %v439
      %469 = vmatpush1.bf16.msra.mxu0 %v438
      %470 = vmatprep.subr.bf16.mxu0 %v437
      %471 = vmatpush1.bf16.msra.mxu0 %v436
      %472 = vmatprep.subr.bf16.mxu0 %v435
      %473 = vmatpush1.bf16.msra.mxu0 %v434
      %474 = vmatprep.subr.bf16.mxu0 %v433
      %475 = vmatpush1.bf16.msra.mxu0 %v432
      %476 = vmatprep.subr.bf16.mxu0 %v431
      %477 = vmatpush1.bf16.msra.mxu0 %v430
      %478 = vmatprep.subr.bf16.mxu0 0
      %479 = vmatpush2.bf16.msra.mxu0 0
      %480 = vmatprep.subr.bf16.mxu0 0
      %481 = vmatpush2.bf16.msra.mxu0 0
      %482 = vmatprep.subr.bf16.mxu0 0
      %483 = vmatpush2.bf16.msra.mxu0 0
      %484 = vmatprep.subr.bf16.mxu0 0
      %485 = vmatpush2.bf16.msra.mxu0 0
      %486 = vmatprep.subr.bf16.mxu0 0
      %487 = vmatpush2.bf16.msra.mxu0 0
      %488 = vmatprep.subr.bf16.mxu0 0
      %489 = vmatpush2.bf16.msra.mxu0 0
      %490 = vmatprep.subr.bf16.mxu0 0
      %491 = vmatpush2.bf16.msra.mxu0 0
      %492 = vmatprep.subr.bf16.mxu0 0
      %493 = vmatpush2.bf16.msra.mxu0 0
      %494 = vmatprep.mubr.bf16.mxu0 0
      %495 = vmatmul.mubr.bf16.gmra.mxu0 %v350
      %v496 = vpop.f32.mrf.mxu0
      %v497 = vadd.f32 %v279, %v496
      %v498 = vpop.f32.mrf.mxu0
      %v499 = vadd.f32 %v283, %v498
      %v500 = vpop.f32.mrf.mxu0
      %v501 = vadd.f32 %v279, %v500
      %v502 = vpop.f32.mrf.mxu0
      %v503 = vadd.f32 %v283, %v502
      %504 = vmatprep.mubr.bf16.mxu0 0
      %505 = vmatmul.mubr.bf16.gmra.mxu0 %v351
      %v506 = vpop.f32.mrf.mxu0
      %v507 = vadd.f32 %v279, %v506
      %v508 = vpop.f32.mrf.mxu0
      %v509 = vadd.f32 %v283, %v508
      %v510 = vpop.f32.mrf.mxu0
      %v511 = vadd.f32 %v279, %v510
      %v512 = vpop.f32.mrf.mxu0
      %v513 = vadd.f32 %v283, %v512
      %514 = vmatprep.mubr.bf16.mxu0 0
      %515 = vmatmul.mubr.bf16.gmra.mxu0 %v352
      %v516 = vpop.f32.mrf.mxu0
      %v517 = vadd.f32 %v279, %v516
      %v518 = vpop.f32.mrf.mxu0
      %v519 = vadd.f32 %v283, %v518
      %v520 = vpop.f32.mrf.mxu0
      %v521 = vadd.f32 %v279, %v520
      %v522 = vpop.f32.mrf.mxu0
      %v523 = vadd.f32 %v283, %v522
      %524 = vmatprep.mubr.bf16.mxu0 0
      %525 = vmatmul.mubr.bf16.gmra.mxu0 %v353
      %v526 = vpop.f32.mrf.mxu0
      %v527 = vadd.f32 %v279, %v526
      %v528 = vpop.f32.mrf.mxu0
      %v529 = vadd.f32 %v283, %v528
      %v530 = vpop.f32.mrf.mxu0
      %v531 = vadd.f32 %v279, %v530
      %v532 = vpop.f32.mrf.mxu0
      %v533 = vadd.f32 %v283, %v532
      %534 = vmatprep.mubr.bf16.mxu0 0
      %535 = vmatmul.mubr.bf16.gmra.mxu0 %v354
      %v536 = vpop.f32.mrf.mxu0
      %v537 = vadd.f32 %v279, %v536
      %v538 = vpop.f32.mrf.mxu0
      %v539 = vadd.f32 %v283, %v538
      %v540 = vpop.f32.mrf.mxu0
      %v541 = vadd.f32 %v279, %v540
      %v542 = vpop.f32.mrf.mxu0
      %v543 = vadd.f32 %v283, %v542
      %544 = vmatprep.mubr.bf16.mxu0 0
      %545 = vmatmul.mubr.bf16.gmra.mxu0 %v355
      %v546 = vpop.f32.mrf.mxu0
      %v547 = vadd.f32 %v279, %v546
      %v548 = vpop.f32.mrf.mxu0
      %v549 = vadd.f32 %v283, %v548
      %v550 = vpop.f32.mrf.mxu0
      %v551 = vadd.f32 %v279, %v550
      %v552 = vpop.f32.mrf.mxu0
      %v553 = vadd.f32 %v283, %v552
      %554 = vmatprep.mubr.bf16.mxu0 0
      %555 = vmatmul.mubr.bf16.gmra.mxu0 %v356
      %v556 = vpop.f32.mrf.mxu0
      %v557 = vadd.f32 %v279, %v556
      %v558 = vpop.f32.mrf.mxu0
      %v559 = vadd.f32 %v283, %v558
      %v560 = vpop.f32.mrf.mxu0
      %v561 = vadd.f32 %v279, %v560
      %v562 = vpop.f32.mrf.mxu0
      %v563 = vadd.f32 %v283, %v562
      %564 = vmatprep.mubr.bf16.mxu0 0
      %565 = vmatmul.mubr.bf16.gmra.mxu0 %v357
      %v566 = vpop.f32.mrf.mxu0
      %v567 = vadd.f32 %v279, %v566
      %v568 = vpop.f32.mrf.mxu0
      %v569 = vadd.f32 %v283, %v568
      %v570 = vpop.f32.mrf.mxu0
      %v571 = vadd.f32 %v279, %v570
      %v572 = vpop.f32.mrf.mxu0
      %v573 = vadd.f32 %v283, %v572
      %574 = vmatprep.mubr.bf16.mxu0 0
      %575 = vmatmul.mubr.bf16.gmra.mxu0 %v358
      %v576 = vpop.f32.mrf.mxu0
      %v577 = vadd.f32 %v279, %v576
      %v578 = vpop.f32.mrf.mxu0
      %v579 = vadd.f32 %v283, %v578
      %v580 = vpop.f32.mrf.mxu0
      %v581 = vadd.f32 %v279, %v580
      %v582 = vpop.f32.mrf.mxu0
      %v583 = vadd.f32 %v283, %v582
      %584 = vmatprep.mubr.bf16.mxu0 0
      %585 = vmatmul.mubr.bf16.gmra.mxu0 %v359
      %v586 = vpop.f32.mrf.mxu0
      %v587 = vadd.f32 %v279, %v586
      %v588 = vpop.f32.mrf.mxu0
      %v589 = vadd.f32 %v283, %v588
      %v590 = vpop.f32.mrf.mxu0
      %v591 = vadd.f32 %v279, %v590
      %v592 = vpop.f32.mrf.mxu0
      %v593 = vadd.f32 %v283, %v592
      %594 = vmatprep.mubr.bf16.mxu0 0
      %595 = vmatmul.mubr.bf16.gmra.mxu0 %v360
      %v596 = vpop.f32.mrf.mxu0
      %v597 = vadd.f32 %v279, %v596
      %v598 = vpop.f32.mrf.mxu0
      %v599 = vadd.f32 %v283, %v598
      %v600 = vpop.f32.mrf.mxu0
      %v601 = vadd.f32 %v279, %v600
      %v602 = vpop.f32.mrf.mxu0
      %v603 = vadd.f32 %v283, %v602
      %604 = vmatprep.mubr.bf16.mxu0 0
      %605 = vmatmul.mubr.bf16.gmra.mxu0 %v361
      %v606 = vpop.f32.mrf.mxu0
      %v607 = vadd.f32 %v279, %v606
      %v608 = vpop.f32.mrf.mxu0
      %v609 = vadd.f32 %v283, %v608
      %v610 = vpop.f32.mrf.mxu0
      %v611 = vadd.f32 %v279, %v610
      %v612 = vpop.f32.mrf.mxu0
      %v613 = vadd.f32 %v283, %v612
      %614 = vmatprep.mubr.bf16.mxu0 0
      %615 = vmatmul.mubr.bf16.gmra.mxu0 %v362
      %v616 = vpop.f32.mrf.mxu0
      %v617 = vadd.f32 %v279, %v616
      %v618 = vpop.f32.mrf.mxu0
      %v619 = vadd.f32 %v283, %v618
      %v620 = vpop.f32.mrf.mxu0
      %v621 = vadd.f32 %v279, %v620
      %v622 = vpop.f32.mrf.mxu0
      %v623 = vadd.f32 %v283, %v622
      %624 = vmatprep.mubr.bf16.mxu0 0
      %625 = vmatmul.mubr.bf16.gmra.mxu0 %v363
      %v626 = vpop.f32.mrf.mxu0
      %v627 = vadd.f32 %v279, %v626
      %v628 = vpop.f32.mrf.mxu0
      %v629 = vadd.f32 %v283, %v628
      %v630 = vpop.f32.mrf.mxu0
      %v631 = vadd.f32 %v279, %v630
      %v632 = vpop.f32.mrf.mxu0
      %v633 = vadd.f32 %v283, %v632
      %634 = vmatprep.mubr.bf16.mxu0 0
      %635 = vmatmul.mubr.bf16.gmra.mxu0 %v364
      %v636 = vpop.f32.mrf.mxu0
      %v637 = vadd.f32 %v279, %v636
      %v638 = vpop.f32.mrf.mxu0
      %v639 = vadd.f32 %v283, %v638
      %v640 = vpop.f32.mrf.mxu0
      %v641 = vadd.f32 %v279, %v640
      %v642 = vpop.f32.mrf.mxu0
      %v643 = vadd.f32 %v283, %v642
      %644 = vmatprep.mubr.bf16.mxu0 0
      %645 = vmatmul.mubr.bf16.gmra.mxu0 %v365
      %v646 = vpop.f32.mrf.mxu0
      %v647 = vadd.f32 %v279, %v646
      %v648 = vpop.f32.mrf.mxu0
      %v649 = vadd.f32 %v283, %v648
      %v650 = vpop.f32.mrf.mxu0
      %v651 = vadd.f32 %v279, %v650
      %v652 = vpop.f32.mrf.mxu0
      %v653 = vadd.f32 %v283, %v652
      %654 = vdwg.mxu0
      %v655 = vmax.f32 %v497, 0.0
      %v656 = vmax.f32 %v499, 0.0
      %v657 = vmax.f32 %v501, 0.0
      %v658 = vmax.f32 %v503, 0.0
      %v659 = vmax.f32 %v507, 0.0
      %v660 = vmax.f32 %v509, 0.0
      %v661 = vmax.f32 %v511, 0.0
      %v662 = vmax.f32 %v513, 0.0
      %v663 = vmax.f32 %v517, 0.0
      %v664 = vmax.f32 %v519, 0.0
      %v665 = vmax.f32 %v521, 0.0
      %v666 = vmax.f32 %v523, 0.0
      %v667 = vmax.f32 %v527, 0.0
      %v668 = vmax.f32 %v529, 0.0
      %v669 = vmax.f32 %v531, 0.0
      %v670 = vmax.f32 %v533, 0.0
      %v671 = vmax.f32 %v537, 0.0
      %v672 = vmax.f32 %v539, 0.0
      %v673 = vmax.f32 %v541, 0.0
      %v674 = vmax.f32 %v543, 0.0
      %v675 = vmax.f32 %v547, 0.0
      %v676 = vmax.f32 %v549, 0.0
      %v677 = vmax.f32 %v551, 0.0
      %v678 = vmax.f32 %v553, 0.0
      %v679 = vmax.f32 %v557, 0.0
      %v680 = vmax.f32 %v559, 0.0
      %v681 = vmax.f32 %v561, 0.0
      %v682 = vmax.f32 %v563, 0.0
      %v683 = vmax.f32 %v567, 0.0
      %v684 = vmax.f32 %v569, 0.0
      %v685 = vmax.f32 %v571, 0.0
      %v686 = vmax.f32 %v573, 0.0
      %v687 = vmax.f32 %v577, 0.0
      %v688 = vmax.f32 %v579, 0.0
      %v689 = vmax.f32 %v581, 0.0
      %v690 = vmax.f32 %v583, 0.0
      %v691 = vmax.f32 %v587, 0.0
      %v692 = vmax.f32 %v589, 0.0
      %v693 = vmax.f32 %v591, 0.0
      %v694 = vmax.f32 %v593, 0.0
      %v695 = vmax.f32 %v597, 0.0
      %v696 = vmax.f32 %v599, 0.0
      %v697 = vmax.f32 %v601, 0.0
      %v698 = vmax.f32 %v603, 0.0
      %v699 = vmax.f32 %v607, 0.0
      %v700 = vmax.f32 %v609, 0.0
      %v701 = vmax.f32 %v611, 0.0
      %v702 = vmax.f32 %v613, 0.0
      %v703 = vmax.f32 %v617, 0.0
      %v704 = vmax.f32 %v619, 0.0
      %v705 = vmax.f32 %v621, 0.0
      %v706 = vmax.f32 %v623, 0.0
      %v707 = vmax.f32 %v627, 0.0
      %v708 = vmax.f32 %v629, 0.0
      %v709 = vmax.f32 %v631, 0.0
      %v710 = vmax.f32 %v633, 0.0
      %v711 = vmax.f32 %v637, 0.0
      %v712 = vmax.f32 %v639, 0.0
      %v713 = vmax.f32 %v641, 0.0
      %v714 = vmax.f32 %v643, 0.0
      %v715 = vmax.f32 %v647, 0.0
      %v716 = vmax.f32 %v649, 0.0
      %v717 = vmax.f32 %v651, 0.0
      %v718 = vmax.f32 %v653, 0.0
      %v719 = vpack.c.bf16 %v657, %v655
      %v720 = vpack.c.bf16 %v658, %v656
      %v721 = vpack.c.bf16 %v661, %v659
      %v722 = vpack.c.bf16 %v662, %v660
      %v723 = vpack.c.bf16 %v665, %v663
      %v724 = vpack.c.bf16 %v666, %v664
      %v725 = vpack.c.bf16 %v669, %v667
      %v726 = vpack.c.bf16 %v670, %v668
      %v727 = vpack.c.bf16 %v673, %v671
      %v728 = vpack.c.bf16 %v674, %v672
      %v729 = vpack.c.bf16 %v677, %v675
      %v730 = vpack.c.bf16 %v678, %v676
      %v731 = vpack.c.bf16 %v681, %v679
      %v732 = vpack.c.bf16 %v682, %v680
      %v733 = vpack.c.bf16 %v685, %v683
      %v734 = vpack.c.bf16 %v686, %v684
      %v735 = vpack.c.bf16 %v689, %v687
      %v736 = vpack.c.bf16 %v690, %v688
      %v737 = vpack.c.bf16 %v693, %v691
      %v738 = vpack.c.bf16 %v694, %v692
      %v739 = vpack.c.bf16 %v697, %v695
      %v740 = vpack.c.bf16 %v698, %v696
      %v741 = vpack.c.bf16 %v701, %v699
      %v742 = vpack.c.bf16 %v702, %v700
      %v743 = vpack.c.bf16 %v705, %v703
      %v744 = vpack.c.bf16 %v706, %v704
      %v745 = vpack.c.bf16 %v709, %v707
      %v746 = vpack.c.bf16 %v710, %v708
      %v747 = vpack.c.bf16 %v713, %v711
      %v748 = vpack.c.bf16 %v714, %v712
      %v749 = vpack.c.bf16 %v717, %v715
      %v750 = vpack.c.bf16 %v718, %v716
      %v751 = vld [vmem:[%s3] sm:$0xf]
      %v752 = vld [vmem:[%s3 + $0x4] sm:$0xf]
      %v753 = vld [vmem:[%s3 + $0x8] sm:$0xf]
      %v754 = vld [vmem:[%s3 + $0xc] sm:$0xf]
      %v755 = vld [vmem:[%s3 + $0x10] sm:$0xf]
      %v756 = vld [vmem:[%s3 + $0x14] sm:$0xf]
      %v757 = vld [vmem:[%s3 + $0x18] sm:$0xf]
      %v758 = vld [vmem:[%s3 + $0x1c] sm:$0xf]
      %v759 = vld [vmem:[%s3 + $0x20] sm:$0xf]
      %v760 = vld [vmem:[%s3 + $0x24] sm:$0xf]
      %v761 = vld [vmem:[%s3 + $0x28] sm:$0xf]
      %v762 = vld [vmem:[%s3 + $0x2c] sm:$0xf]
      %v763 = vld [vmem:[%s3 + $0x30] sm:$0xf]
      %v764 = vld [vmem:[%s3 + $0x34] sm:$0xf]
      %v765 = vld [vmem:[%s3 + $0x38] sm:$0xf]
      %v766 = vld [vmem:[%s3 + $0x3c] sm:$0xf]
      %v767 = vld [vmem:[%s3 + $0x40] sm:$0xf]
      %v768 = vld [vmem:[%s3 + $0x44] sm:$0xf]
      %v769 = vld [vmem:[%s3 + $0x48] sm:$0xf]
      %v770 = vld [vmem:[%s3 + $0x4c] sm:$0xf]
      %v771 = vld [vmem:[%s3 + $0x50] sm:$0xf]
      %v772 = vld [vmem:[%s3 + $0x54] sm:$0xf]
      %v773 = vld [vmem:[%s3 + $0x58] sm:$0xf]
      %v774 = vld [vmem:[%s3 + $0x5c] sm:$0xf]
      %v775 = vld [vmem:[%s3 + $0x60] sm:$0xf]
      %v776 = vld [vmem:[%s3 + $0x64] sm:$0xf]
      %v777 = vld [vmem:[%s3 + $0x68] sm:$0xf]
      %v778 = vld [vmem:[%s3 + $0x6c] sm:$0xf]
      %v779 = vld [vmem:[%s3 + $0x70] sm:$0xf]
      %v780 = vld [vmem:[%s3 + $0x74] sm:$0xf]
      %v781 = vld [vmem:[%s3 + $0x78] sm:$0xf]
      %v782 = vld [vmem:[%s3 + $0x7c] sm:$0xf]
      %v783 = vld [vmem:[%s4] sm:$0x1]
      %v785 = vlaneseq
      %v786 = vshrl.u32 %v785, 7
      %v787 = vsub.s32 0, %v786
      %v788 = vrot.slane %v783, %v787
      %v822 = vunpack.c.l.b16 %v751
      %v823 = vunpack.c.l.b16 %v752
      %v824 = vunpack.c.l.b16 %v753
      %v825 = vunpack.c.l.b16 %v754
      %v826 = vunpack.c.l.b16 %v755
      %v827 = vunpack.c.l.b16 %v756
      %v828 = vunpack.c.l.b16 %v757
      %v829 = vunpack.c.l.b16 %v758
      %v830 = vunpack.c.l.b16 %v759
      %v831 = vunpack.c.l.b16 %v760
      %v832 = vunpack.c.l.b16 %v761
      %v833 = vunpack.c.l.b16 %v762
      %v834 = vunpack.c.l.b16 %v763
      %v835 = vunpack.c.l.b16 %v764
      %v836 = vunpack.c.l.b16 %v765
      %v837 = vunpack.c.l.b16 %v766
      %v838 = vunpack.c.l.b16 %v767
      %v839 = vunpack.c.l.b16 %v768
      %v840 = vunpack.c.l.b16 %v769
      %v841 = vunpack.c.l.b16 %v770
      %v842 = vunpack.c.l.b16 %v771
      %v843 = vunpack.c.l.b16 %v772
      %v844 = vunpack.c.l.b16 %v773
      %v845 = vunpack.c.l.b16 %v774
      %v846 = vunpack.c.l.b16 %v775
      %v847 = vunpack.c.l.b16 %v776
      %v848 = vunpack.c.l.b16 %v777
      %v849 = vunpack.c.l.b16 %v778
      %v850 = vunpack.c.l.b16 %v779
      %v851 = vunpack.c.l.b16 %v780
      %v852 = vunpack.c.l.b16 %v781
      %v853 = vunpack.c.l.b16 %v782
      %v854 = vpack.c.b16 %v823, %v822
      %v855 = vpack.c.b16 %v825, %v824
      %v856 = vpack.c.b16 %v827, %v826
      %v857 = vpack.c.b16 %v829, %v828
      %v858 = vpack.c.b16 %v831, %v830
      %v859 = vpack.c.b16 %v833, %v832
      %v860 = vpack.c.b16 %v835, %v834
      %v861 = vpack.c.b16 %v837, %v836
      %v862 = vpack.c.b16 %v839, %v838
      %v863 = vpack.c.b16 %v841, %v840
      %v864 = vpack.c.b16 %v843, %v842
      %v865 = vpack.c.b16 %v845, %v844
      %v866 = vpack.c.b16 %v847, %v846
      %v867 = vpack.c.b16 %v849, %v848
      %v868 = vpack.c.b16 %v851, %v850
      %v869 = vpack.c.b16 %v853, %v852
      %886 = vmatprep.subr.bf16.mxu0 0
      %887 = vmatpush1.bf16.msra.mxu0 %v861
      %888 = vmatprep.subr.bf16.mxu0 0
      %889 = vmatpush1.bf16.msra.mxu0 %v860
      %890 = vmatprep.subr.bf16.mxu0 0
      %891 = vmatpush1.bf16.msra.mxu0 %v859
      %892 = vmatprep.subr.bf16.mxu0 0
      %893 = vmatpush1.bf16.msra.mxu0 %v858
      %894 = vmatprep.subr.bf16.mxu0 0
      %895 = vmatpush1.bf16.msra.mxu0 %v857
      %896 = vmatprep.subr.bf16.mxu0 0
      %897 = vmatpush1.bf16.msra.mxu0 %v856
      %898 = vmatprep.subr.bf16.mxu0 0
      %899 = vmatpush1.bf16.msra.mxu0 %v855
      %900 = vmatprep.subr.bf16.mxu0 0
      %901 = vmatpush1.bf16.msra.mxu0 %v854
      %902 = vmatprep.subr.bf16.mxu0 0
      %903 = vmatpush2.bf16.msra.mxu0 %v869
      %904 = vmatprep.subr.bf16.mxu0 0
      %905 = vmatpush2.bf16.msra.mxu0 %v868
      %906 = vmatprep.subr.bf16.mxu0 0
      %907 = vmatpush2.bf16.msra.mxu0 %v867
      %908 = vmatprep.subr.bf16.mxu0 0
      %909 = vmatpush2.bf16.msra.mxu0 %v866
      %910 = vmatprep.subr.bf16.mxu0 0
      %911 = vmatpush2.bf16.msra.mxu0 %v865
      %912 = vmatprep.subr.bf16.mxu0 0
      %913 = vmatpush2.bf16.msra.mxu0 %v864
      %914 = vmatprep.subr.bf16.mxu0 0
      %915 = vmatpush2.bf16.msra.mxu0 %v863
      %916 = vmatprep.subr.bf16.mxu0 0
      %917 = vmatpush2.bf16.msra.mxu0 %v862
      %918 = vmatprep.mubr.bf16.mxu0 %v720
      %919 = vmatmul.mubr.bf16.gmra.mxu0 %v719
      %v920 = vpop.f32.mrf.mxu0
      %v921 = vadd.f32 %v788, %v920
      %v922 = vpop.f32.mrf.mxu0
      %v923 = vpop.f32.mrf.mxu0
      %v924 = vadd.f32 %v788, %v923
      %v925 = vpop.f32.mrf.mxu0
      %926 = vmatprep.mubr.bf16.mxu0 %v722
      %927 = vmatmul.mubr.bf16.gmra.mxu0 %v721
      %v928 = vpop.f32.mrf.mxu0
      %v929 = vadd.f32 %v788, %v928
      %v930 = vpop.f32.mrf.mxu0
      %v931 = vpop.f32.mrf.mxu0
      %v932 = vadd.f32 %v788, %v931
      %v933 = vpop.f32.mrf.mxu0
      %934 = vmatprep.mubr.bf16.mxu0 %v724
      %935 = vmatmul.mubr.bf16.gmra.mxu0 %v723
      %v936 = vpop.f32.mrf.mxu0
      %v937 = vadd.f32 %v788, %v936
      %v938 = vpop.f32.mrf.mxu0
      %v939 = vpop.f32.mrf.mxu0
      %v940 = vadd.f32 %v788, %v939
      %v941 = vpop.f32.mrf.mxu0
      %942 = vmatprep.mubr.bf16.mxu0 %v726
      %943 = vmatmul.mubr.bf16.gmra.mxu0 %v725
      %v944 = vpop.f32.mrf.mxu0
      %v945 = vadd.f32 %v788, %v944
      %v946 = vpop.f32.mrf.mxu0
      %v947 = vpop.f32.mrf.mxu0
      %v948 = vadd.f32 %v788, %v947
      %v949 = vpop.f32.mrf.mxu0
      %950 = vmatprep.mubr.bf16.mxu0 %v728
      %951 = vmatmul.mubr.bf16.gmra.mxu0 %v727
      %v952 = vpop.f32.mrf.mxu0
      %v953 = vadd.f32 %v788, %v952
      %v954 = vpop.f32.mrf.mxu0
      %v955 = vpop.f32.mrf.mxu0
      %v956 = vadd.f32 %v788, %v955
      %v957 = vpop.f32.mrf.mxu0
      %958 = vmatprep.mubr.bf16.mxu0 %v730
      %959 = vmatmul.mubr.bf16.gmra.mxu0 %v729
      %v960 = vpop.f32.mrf.mxu0
      %v961 = vadd.f32 %v788, %v960
      %v962 = vpop.f32.mrf.mxu0
      %v963 = vpop.f32.mrf.mxu0
      %v964 = vadd.f32 %v788, %v963
      %v965 = vpop.f32.mrf.mxu0
      %966 = vmatprep.mubr.bf16.mxu0 %v732
      %967 = vmatmul.mubr.bf16.gmra.mxu0 %v731
      %v968 = vpop.f32.mrf.mxu0
      %v969 = vadd.f32 %v788, %v968
      %v970 = vpop.f32.mrf.mxu0
      %v971 = vpop.f32.mrf.mxu0
      %v972 = vadd.f32 %v788, %v971
      %v973 = vpop.f32.mrf.mxu0
      %974 = vmatprep.mubr.bf16.mxu0 %v734
      %975 = vmatmul.mubr.bf16.gmra.mxu0 %v733
      %v976 = vpop.f32.mrf.mxu0
      %v977 = vadd.f32 %v788, %v976
      %v978 = vpop.f32.mrf.mxu0
      %v979 = vpop.f32.mrf.mxu0
      %v980 = vadd.f32 %v788, %v979
      %v981 = vpop.f32.mrf.mxu0
      %982 = vmatprep.mubr.bf16.mxu0 %v736
      %983 = vmatmul.mubr.bf16.gmra.mxu0 %v735
      %v984 = vpop.f32.mrf.mxu0
      %v985 = vadd.f32 %v788, %v984
      %v986 = vpop.f32.mrf.mxu0
      %v987 = vpop.f32.mrf.mxu0
      %v988 = vadd.f32 %v788, %v987
      %v989 = vpop.f32.mrf.mxu0
      %990 = vmatprep.mubr.bf16.mxu0 %v738
      %991 = vmatmul.mubr.bf16.gmra.mxu0 %v737
      %v992 = vpop.f32.mrf.mxu0
      %v993 = vadd.f32 %v788, %v992
      %v994 = vpop.f32.mrf.mxu0
      %v995 = vpop.f32.mrf.mxu0
      %v996 = vadd.f32 %v788, %v995
      %v997 = vpop.f32.mrf.mxu0
      %998 = vmatprep.mubr.bf16.mxu0 %v740
      %999 = vmatmul.mubr.bf16.gmra.mxu0 %v739
      %v1000 = vpop.f32.mrf.mxu0
      %v1001 = vadd.f32 %v788, %v1000
      %v1002 = vpop.f32.mrf.mxu0
      %v1003 = vpop.f32.mrf.mxu0
      %v1004 = vadd.f32 %v788, %v1003
      %v1005 = vpop.f32.mrf.mxu0
      %1006 = vmatprep.mubr.bf16.mxu0 %v742
      %1007 = vmatmul.mubr.bf16.gmra.mxu0 %v741
      %v1008 = vpop.f32.mrf.mxu0
      %v1009 = vadd.f32 %v788, %v1008
      %v1010 = vpop.f32.mrf.mxu0
      %v1011 = vpop.f32.mrf.mxu0
      %v1012 = vadd.f32 %v788, %v1011
      %v1013 = vpop.f32.mrf.mxu0
      %1014 = vmatprep.mubr.bf16.mxu0 %v744
      %1015 = vmatmul.mubr.bf16.gmra.mxu0 %v743
      %v1016 = vpop.f32.mrf.mxu0
      %v1017 = vadd.f32 %v788, %v1016
      %v1018 = vpop.f32.mrf.mxu0
      %v1019 = vpop.f32.mrf.mxu0
      %v1020 = vadd.f32 %v788, %v1019
      %v1021 = vpop.f32.mrf.mxu0
      %1022 = vmatprep.mubr.bf16.mxu0 %v746
      %1023 = vmatmul.mubr.bf16.gmra.mxu0 %v745
      %v1024 = vpop.f32.mrf.mxu0
      %v1025 = vadd.f32 %v788, %v1024
      %v1026 = vpop.f32.mrf.mxu0
      %v1027 = vpop.f32.mrf.mxu0
      %v1028 = vadd.f32 %v788, %v1027
      %v1029 = vpop.f32.mrf.mxu0
      %1030 = vmatprep.mubr.bf16.mxu0 %v748
      %1031 = vmatmul.mubr.bf16.gmra.mxu0 %v747
      %v1032 = vpop.f32.mrf.mxu0
      %v1033 = vadd.f32 %v788, %v1032
      %v1034 = vpop.f32.mrf.mxu0
      %v1035 = vpop.f32.mrf.mxu0
      %v1036 = vadd.f32 %v788, %v1035
      %v1037 = vpop.f32.mrf.mxu0
      %1038 = vmatprep.mubr.bf16.mxu0 %v750
      %1039 = vmatmul.mubr.bf16.gmra.mxu0 %v749
      %v1040 = vpop.f32.mrf.mxu0
      %v1041 = vadd.f32 %v788, %v1040
      %v1042 = vpop.f32.mrf.mxu0
      %v1043 = vpop.f32.mrf.mxu0
      %v1044 = vadd.f32 %v788, %v1043
      %v1045 = vpop.f32.mrf.mxu0
      %1046 = vdwg.mxu0
      %v1047 = vmax.f32 %v921, 0.0
      %v1048 = vmax.f32 %v924, 0.0
      %v1049 = vmax.f32 %v929, 0.0
      %v1050 = vmax.f32 %v932, 0.0
      %v1051 = vmax.f32 %v937, 0.0
      %v1052 = vmax.f32 %v940, 0.0
      %v1053 = vmax.f32 %v945, 0.0
      %v1054 = vmax.f32 %v948, 0.0
      %v1055 = vmax.f32 %v953, 0.0
      %v1056 = vmax.f32 %v956, 0.0
      %v1057 = vmax.f32 %v961, 0.0
      %v1058 = vmax.f32 %v964, 0.0
      %v1059 = vmax.f32 %v969, 0.0
      %v1060 = vmax.f32 %v972, 0.0
      %v1061 = vmax.f32 %v977, 0.0
      %v1062 = vmax.f32 %v980, 0.0
      %v1063 = vmax.f32 %v985, 0.0
      %v1064 = vmax.f32 %v988, 0.0
      %v1065 = vmax.f32 %v993, 0.0
      %v1066 = vmax.f32 %v996, 0.0
      %v1067 = vmax.f32 %v1001, 0.0
      %v1068 = vmax.f32 %v1004, 0.0
      %v1069 = vmax.f32 %v1009, 0.0
      %v1070 = vmax.f32 %v1012, 0.0
      %v1071 = vmax.f32 %v1017, 0.0
      %v1072 = vmax.f32 %v1020, 0.0
      %v1073 = vmax.f32 %v1025, 0.0
      %v1074 = vmax.f32 %v1028, 0.0
      %v1075 = vmax.f32 %v1033, 0.0
      %v1076 = vmax.f32 %v1036, 0.0
      %v1077 = vmax.f32 %v1041, 0.0
      %v1078 = vmax.f32 %v1044, 0.0
      %v1111 = vcombine.high %v1047, %v1047
      %v1113 = vunpack.c.l.s4 1983009808
      %v1114 = vunpack.c.0.s8 %v1113
      %v1115 = vlaneseq
      %v1116 = vshrl.u32 %v1115, 7
      %v1117 = vsub.s32 %v1114, %v1116
      %v1118 = vrot.slane %v1047, %v1117
      %v1120 = vunpack.c.l.s4 1983009808
      %v1121 = vunpack.c.0.s8 %v1120
      %v1122 = vlaneseq
      %v1123 = vshrl.u32 %v1122, 7
      %v1124 = vsub.s32 %v1121, %v1123
      %v1125 = vrot.slane %v1111, %v1124
      %v1126 = vcombine.high %v1118, %v1118
      %v1127 = vcombine.high %v1125, %v1125
      %v1128 = vcombine.high %v1048, %v1048
      %v1130 = vunpack.c.l.s4 1983009808
      %v1131 = vunpack.c.0.s8 %v1130
      %v1132 = vlaneseq
      %v1133 = vshrl.u32 %v1132, 7
      %v1134 = vsub.s32 %v1131, %v1133
      %v1135 = vrot.slane %v1048, %v1134
      %v1137 = vunpack.c.l.s4 1983009808
      %v1138 = vunpack.c.0.s8 %v1137
      %v1139 = vlaneseq
      %v1140 = vshrl.u32 %v1139, 7
      %v1141 = vsub.s32 %v1138, %v1140
      %v1142 = vrot.slane %v1128, %v1141
      %v1143 = vcombine.high %v1135, %v1135
      %v1144 = vcombine.high %v1142, %v1142
      %v1145 = vcombine.high %v1049, %v1049
      %v1147 = vunpack.c.l.s4 1983009808
      %v1148 = vunpack.c.0.s8 %v1147
      %v1149 = vlaneseq
      %v1150 = vshrl.u32 %v1149, 7
      %v1151 = vsub.s32 %v1148, %v1150
      %v1152 = vrot.slane %v1049, %v1151
      %v1154 = vunpack.c.l.s4 1983009808
      %v1155 = vunpack.c.0.s8 %v1154
      %v1156 = vlaneseq
      %v1157 = vshrl.u32 %v1156, 7
      %v1158 = vsub.s32 %v1155, %v1157
      %v1159 = vrot.slane %v1145, %v1158
      %v1160 = vcombine.high %v1152, %v1152
      %v1161 = vcombine.high %v1159, %v1159
      %v1162 = vcombine.high %v1050, %v1050
      %v1164 = vunpack.c.l.s4 1983009808
      %v1165 = vunpack.c.0.s8 %v1164
      %v1166 = vlaneseq
      %v1167 = vshrl.u32 %v1166, 7
      %v1168 = vsub.s32 %v1165, %v1167
      %v1169 = vrot.slane %v1050, %v1168
      %v1171 = vunpack.c.l.s4 1983009808
      %v1172 = vunpack.c.0.s8 %v1171
      %v1173 = vlaneseq
      %v1174 = vshrl.u32 %v1173, 7
      %v1175 = vsub.s32 %v1172, %v1174
      %v1176 = vrot.slane %v1162, %v1175
      %v1177 = vcombine.high %v1169, %v1169
      %v1178 = vcombine.high %v1176, %v1176
      %v1179 = vcombine.high %v1051, %v1051
      %v1181 = vunpack.c.l.s4 1983009808
      %v1182 = vunpack.c.0.s8 %v1181
      %v1183 = vlaneseq
      %v1184 = vshrl.u32 %v1183, 7
      %v1185 = vsub.s32 %v1182, %v1184
      %v1186 = vrot.slane %v1051, %v1185
      %v1188 = vunpack.c.l.s4 1983009808
      %v1189 = vunpack.c.0.s8 %v1188
      %v1190 = vlaneseq
      %v1191 = vshrl.u32 %v1190, 7
      %v1192 = vsub.s32 %v1189, %v1191
      %v1193 = vrot.slane %v1179, %v1192
      %v1194 = vcombine.high %v1186, %v1186
      %v1195 = vcombine.high %v1193, %v1193
      %v1196 = vcombine.high %v1052, %v1052
      %v1198 = vunpack.c.l.s4 1983009808
      %v1199 = vunpack.c.0.s8 %v1198
      %v1200 = vlaneseq
      %v1201 = vshrl.u32 %v1200, 7
      %v1202 = vsub.s32 %v1199, %v1201
      %v1203 = vrot.slane %v1052, %v1202
      %v1205 = vunpack.c.l.s4 1983009808
      %v1206 = vunpack.c.0.s8 %v1205
      %v1207 = vlaneseq
      %v1208 = vshrl.u32 %v1207, 7
      %v1209 = vsub.s32 %v1206, %v1208
      %v1210 = vrot.slane %v1196, %v1209
      %v1211 = vcombine.high %v1203, %v1203
      %v1212 = vcombine.high %v1210, %v1210
      %v1213 = vcombine.high %v1053, %v1053
      %v1215 = vunpack.c.l.s4 1983009808
      %v1216 = vunpack.c.0.s8 %v1215
      %v1217 = vlaneseq
      %v1218 = vshrl.u32 %v1217, 7
      %v1219 = vsub.s32 %v1216, %v1218
      %v1220 = vrot.slane %v1053, %v1219
      %v1222 = vunpack.c.l.s4 1983009808
      %v1223 = vunpack.c.0.s8 %v1222
      %v1224 = vlaneseq
      %v1225 = vshrl.u32 %v1224, 7
      %v1226 = vsub.s32 %v1223, %v1225
      %v1227 = vrot.slane %v1213, %v1226
      %v1228 = vcombine.high %v1220, %v1220
      %v1229 = vcombine.high %v1227, %v1227
      %v1230 = vcombine.high %v1054, %v1054
      %v1232 = vunpack.c.l.s4 1983009808
      %v1233 = vunpack.c.0.s8 %v1232
      %v1234 = vlaneseq
      %v1235 = vshrl.u32 %v1234, 7
      %v1236 = vsub.s32 %v1233, %v1235
      %v1237 = vrot.slane %v1054, %v1236
      %v1239 = vunpack.c.l.s4 1983009808
      %v1240 = vunpack.c.0.s8 %v1239
      %v1241 = vlaneseq
      %v1242 = vshrl.u32 %v1241, 7
      %v1243 = vsub.s32 %v1240, %v1242
      %v1244 = vrot.slane %v1230, %v1243
      %v1245 = vcombine.high %v1237, %v1237
      %v1246 = vcombine.high %v1244, %v1244
      %v1247 = vcombine.high %v1055, %v1055
      %v1249 = vunpack.c.l.s4 1983009808
      %v1250 = vunpack.c.0.s8 %v1249
      %v1251 = vlaneseq
      %v1252 = vshrl.u32 %v1251, 7
      %v1253 = vsub.s32 %v1250, %v1252
      %v1254 = vrot.slane %v1055, %v1253
      %v1256 = vunpack.c.l.s4 1983009808
      %v1257 = vunpack.c.0.s8 %v1256
      %v1258 = vlaneseq
      %v1259 = vshrl.u32 %v1258, 7
      %v1260 = vsub.s32 %v1257, %v1259
      %v1261 = vrot.slane %v1247, %v1260
      %v1262 = vcombine.high %v1254, %v1254
      %v1263 = vcombine.high %v1261, %v1261
      %v1264 = vcombine.high %v1056, %v1056
      %v1266 = vunpack.c.l.s4 1983009808
      %v1267 = vunpack.c.0.s8 %v1266
      %v1268 = vlaneseq
      %v1269 = vshrl.u32 %v1268, 7
      %v1270 = vsub.s32 %v1267, %v1269
      %v1271 = vrot.slane %v1056, %v1270
      %v1273 = vunpack.c.l.s4 1983009808
      %v1274 = vunpack.c.0.s8 %v1273
      %v1275 = vlaneseq
      %v1276 = vshrl.u32 %v1275, 7
      %v1277 = vsub.s32 %v1274, %v1276
      %v1278 = vrot.slane %v1264, %v1277
      %v1279 = vcombine.high %v1271, %v1271
      %v1280 = vcombine.high %v1278, %v1278
      %v1281 = vcombine.high %v1057, %v1057
      %v1283 = vunpack.c.l.s4 1983009808
      %v1284 = vunpack.c.0.s8 %v1283
      %v1285 = vlaneseq
      %v1286 = vshrl.u32 %v1285, 7
      %v1287 = vsub.s32 %v1284, %v1286
      %v1288 = vrot.slane %v1057, %v1287
      %v1290 = vunpack.c.l.s4 1983009808
      %v1291 = vunpack.c.0.s8 %v1290
      %v1292 = vlaneseq
      %v1293 = vshrl.u32 %v1292, 7
      %v1294 = vsub.s32 %v1291, %v1293
      %v1295 = vrot.slane %v1281, %v1294
      %v1296 = vcombine.high %v1288, %v1288
      %v1297 = vcombine.high %v1295, %v1295
      %v1298 = vcombine.high %v1058, %v1058
      %v1300 = vunpack.c.l.s4 1983009808
      %v1301 = vunpack.c.0.s8 %v1300
      %v1302 = vlaneseq
      %v1303 = vshrl.u32 %v1302, 7
      %v1304 = vsub.s32 %v1301, %v1303
      %v1305 = vrot.slane %v1058, %v1304
      %v1307 = vunpack.c.l.s4 1983009808
      %v1308 = vunpack.c.0.s8 %v1307
      %v1309 = vlaneseq
      %v1310 = vshrl.u32 %v1309, 7
      %v1311 = vsub.s32 %v1308, %v1310
      %v1312 = vrot.slane %v1298, %v1311
      %v1313 = vcombine.high %v1305, %v1305
      %v1314 = vcombine.high %v1312, %v1312
      %v1315 = vcombine.high %v1059, %v1059
      %v1317 = vunpack.c.l.s4 1983009808
      %v1318 = vunpack.c.0.s8 %v1317
      %v1319 = vlaneseq
      %v1320 = vshrl.u32 %v1319, 7
      %v1321 = vsub.s32 %v1318, %v1320
      %v1322 = vrot.slane %v1059, %v1321
      %v1324 = vunpack.c.l.s4 1983009808
      %v1325 = vunpack.c.0.s8 %v1324
      %v1326 = vlaneseq
      %v1327 = vshrl.u32 %v1326, 7
      %v1328 = vsub.s32 %v1325, %v1327
      %v1329 = vrot.slane %v1315, %v1328
      %v1330 = vcombine.high %v1322, %v1322
      %v1331 = vcombine.high %v1329, %v1329
      %v1332 = vcombine.high %v1060, %v1060
      %v1334 = vunpack.c.l.s4 1983009808
      %v1335 = vunpack.c.0.s8 %v1334
      %v1336 = vlaneseq
      %v1337 = vshrl.u32 %v1336, 7
      %v1338 = vsub.s32 %v1335, %v1337
      %v1339 = vrot.slane %v1060, %v1338
      %v1341 = vunpack.c.l.s4 1983009808
      %v1342 = vunpack.c.0.s8 %v1341
      %v1343 = vlaneseq
      %v1344 = vshrl.u32 %v1343, 7
      %v1345 = vsub.s32 %v1342, %v1344
      %v1346 = vrot.slane %v1332, %v1345
      %v1347 = vcombine.high %v1339, %v1339
      %v1348 = vcombine.high %v1346, %v1346
      %v1349 = vcombine.high %v1061, %v1061
      %v1351 = vunpack.c.l.s4 1983009808
      %v1352 = vunpack.c.0.s8 %v1351
      %v1353 = vlaneseq
      %v1354 = vshrl.u32 %v1353, 7
      %v1355 = vsub.s32 %v1352, %v1354
      %v1356 = vrot.slane %v1061, %v1355
      %v1358 = vunpack.c.l.s4 1983009808
      %v1359 = vunpack.c.0.s8 %v1358
      %v1360 = vlaneseq
      %v1361 = vshrl.u32 %v1360, 7
      %v1362 = vsub.s32 %v1359, %v1361
      %v1363 = vrot.slane %v1349, %v1362
      %v1364 = vcombine.high %v1356, %v1356
      %v1365 = vcombine.high %v1363, %v1363
      %v1366 = vcombine.high %v1062, %v1062
      %v1368 = vunpack.c.l.s4 1983009808
      %v1369 = vunpack.c.0.s8 %v1368
      %v1370 = vlaneseq
      %v1371 = vshrl.u32 %v1370, 7
      %v1372 = vsub.s32 %v1369, %v1371
      %v1373 = vrot.slane %v1062, %v1372
      %v1375 = vunpack.c.l.s4 1983009808
      %v1376 = vunpack.c.0.s8 %v1375
      %v1377 = vlaneseq
      %v1378 = vshrl.u32 %v1377, 7
      %v1379 = vsub.s32 %v1376, %v1378
      %v1380 = vrot.slane %v1366, %v1379
      %v1381 = vcombine.high %v1373, %v1373
      %v1382 = vcombine.high %v1380, %v1380
      %v1383 = vcombine.high %v1063, %v1063
      %v1385 = vunpack.c.l.s4 1983009808
      %v1386 = vunpack.c.0.s8 %v1385
      %v1387 = vlaneseq
      %v1388 = vshrl.u32 %v1387, 7
      %v1389 = vsub.s32 %v1386, %v1388
      %v1390 = vrot.slane %v1063, %v1389
      %v1392 = vunpack.c.l.s4 1983009808
      %v1393 = vunpack.c.0.s8 %v1392
      %v1394 = vlaneseq
      %v1395 = vshrl.u32 %v1394, 7
      %v1396 = vsub.s32 %v1393, %v1395
      %v1397 = vrot.slane %v1383, %v1396
      %v1398 = vcombine.high %v1390, %v1390
      %v1399 = vcombine.high %v1397, %v1397
      %v1400 = vcombine.high %v1064, %v1064
      %v1402 = vunpack.c.l.s4 1983009808
      %v1403 = vunpack.c.0.s8 %v1402
      %v1404 = vlaneseq
      %v1405 = vshrl.u32 %v1404, 7
      %v1406 = vsub.s32 %v1403, %v1405
      %v1407 = vrot.slane %v1064, %v1406
      %v1409 = vunpack.c.l.s4 1983009808
      %v1410 = vunpack.c.0.s8 %v1409
      %v1411 = vlaneseq
      %v1412 = vshrl.u32 %v1411, 7
      %v1413 = vsub.s32 %v1410, %v1412
      %v1414 = vrot.slane %v1400, %v1413
      %v1415 = vcombine.high %v1407, %v1407
      %v1416 = vcombine.high %v1414, %v1414
      %v1417 = vcombine.high %v1065, %v1065
      %v1419 = vunpack.c.l.s4 1983009808
      %v1420 = vunpack.c.0.s8 %v1419
      %v1421 = vlaneseq
      %v1422 = vshrl.u32 %v1421, 7
      %v1423 = vsub.s32 %v1420, %v1422
      %v1424 = vrot.slane %v1065, %v1423
      %v1426 = vunpack.c.l.s4 1983009808
      %v1427 = vunpack.c.0.s8 %v1426
      %v1428 = vlaneseq
      %v1429 = vshrl.u32 %v1428, 7
      %v1430 = vsub.s32 %v1427, %v1429
      %v1431 = vrot.slane %v1417, %v1430
      %v1432 = vcombine.high %v1424, %v1424
      %v1433 = vcombine.high %v1431, %v1431
      %v1434 = vcombine.high %v1066, %v1066
      %v1436 = vunpack.c.l.s4 1983009808
      %v1437 = vunpack.c.0.s8 %v1436
      %v1438 = vlaneseq
      %v1439 = vshrl.u32 %v1438, 7
      %v1440 = vsub.s32 %v1437, %v1439
      %v1441 = vrot.slane %v1066, %v1440
      %v1443 = vunpack.c.l.s4 1983009808
      %v1444 = vunpack.c.0.s8 %v1443
      %v1445 = vlaneseq
      %v1446 = vshrl.u32 %v1445, 7
      %v1447 = vsub.s32 %v1444, %v1446
      %v1448 = vrot.slane %v1434, %v1447
      %v1449 = vcombine.high %v1441, %v1441
      %v1450 = vcombine.high %v1448, %v1448
      %v1451 = vcombine.high %v1067, %v1067
      %v1453 = vunpack.c.l.s4 1983009808
      %v1454 = vunpack.c.0.s8 %v1453
      %v1455 = vlaneseq
      %v1456 = vshrl.u32 %v1455, 7
      %v1457 = vsub.s32 %v1454, %v1456
      %v1458 = vrot.slane %v1067, %v1457
      %v1460 = vunpack.c.l.s4 1983009808
      %v1461 = vunpack.c.0.s8 %v1460
      %v1462 = vlaneseq
      %v1463 = vshrl.u32 %v1462, 7
      %v1464 = vsub.s32 %v1461, %v1463
      %v1465 = vrot.slane %v1451, %v1464
      %v1466 = vcombine.high %v1458, %v1458
      %v1467 = vcombine.high %v1465, %v1465
      %v1468 = vcombine.high %v1068, %v1068
      %v1470 = vunpack.c.l.s4 1983009808
      %v1471 = vunpack.c.0.s8 %v1470
      %v1472 = vlaneseq
      %v1473 = vshrl.u32 %v1472, 7
      %v1474 = vsub.s32 %v1471, %v1473
      %v1475 = vrot.slane %v1068, %v1474
      %v1477 = vunpack.c.l.s4 1983009808
      %v1478 = vunpack.c.0.s8 %v1477
      %v1479 = vlaneseq
      %v1480 = vshrl.u32 %v1479, 7
      %v1481 = vsub.s32 %v1478, %v1480
      %v1482 = vrot.slane %v1468, %v1481
      %v1483 = vcombine.high %v1475, %v1475
      %v1484 = vcombine.high %v1482, %v1482
      %v1485 = vcombine.high %v1069, %v1069
      %v1487 = vunpack.c.l.s4 1983009808
      %v1488 = vunpack.c.0.s8 %v1487
      %v1489 = vlaneseq
      %v1490 = vshrl.u32 %v1489, 7
      %v1491 = vsub.s32 %v1488, %v1490
      %v1492 = vrot.slane %v1069, %v1491
      %v1494 = vunpack.c.l.s4 1983009808
      %v1495 = vunpack.c.0.s8 %v1494
      %v1496 = vlaneseq
      %v1497 = vshrl.u32 %v1496, 7
      %v1498 = vsub.s32 %v1495, %v1497
      %v1499 = vrot.slane %v1485, %v1498
      %v1500 = vcombine.high %v1492, %v1492
      %v1501 = vcombine.high %v1499, %v1499
      %v1502 = vcombine.high %v1070, %v1070
      %v1504 = vunpack.c.l.s4 1983009808
      %v1505 = vunpack.c.0.s8 %v1504
      %v1506 = vlaneseq
      %v1507 = vshrl.u32 %v1506, 7
      %v1508 = vsub.s32 %v1505, %v1507
      %v1509 = vrot.slane %v1070, %v1508
      %v1511 = vunpack.c.l.s4 1983009808
      %v1512 = vunpack.c.0.s8 %v1511
      %v1513 = vlaneseq
      %v1514 = vshrl.u32 %v1513, 7
      %v1515 = vsub.s32 %v1512, %v1514
      %v1516 = vrot.slane %v1502, %v1515
      %v1517 = vcombine.high %v1509, %v1509
      %v1518 = vcombine.high %v1516, %v1516
      %v1519 = vcombine.high %v1071, %v1071
      %v1521 = vunpack.c.l.s4 1983009808
      %v1522 = vunpack.c.0.s8 %v1521
      %v1523 = vlaneseq
      %v1524 = vshrl.u32 %v1523, 7
      %v1525 = vsub.s32 %v1522, %v1524
      %v1526 = vrot.slane %v1071, %v1525
      %v1528 = vunpack.c.l.s4 1983009808
      %v1529 = vunpack.c.0.s8 %v1528
      %v1530 = vlaneseq
      %v1531 = vshrl.u32 %v1530, 7
      %v1532 = vsub.s32 %v1529, %v1531
      %v1533 = vrot.slane %v1519, %v1532
      %v1534 = vcombine.high %v1526, %v1526
      %v1535 = vcombine.high %v1533, %v1533
      %v1536 = vcombine.high %v1072, %v1072
      %v1538 = vunpack.c.l.s4 1983009808
      %v1539 = vunpack.c.0.s8 %v1538
      %v1540 = vlaneseq
      %v1541 = vshrl.u32 %v1540, 7
      %v1542 = vsub.s32 %v1539, %v1541
      %v1543 = vrot.slane %v1072, %v1542
      %v1545 = vunpack.c.l.s4 1983009808
      %v1546 = vunpack.c.0.s8 %v1545
      %v1547 = vlaneseq
      %v1548 = vshrl.u32 %v1547, 7
      %v1549 = vsub.s32 %v1546, %v1548
      %v1550 = vrot.slane %v1536, %v1549
      %v1551 = vcombine.high %v1543, %v1543
      %v1552 = vcombine.high %v1550, %v1550
      %v1553 = vcombine.high %v1073, %v1073
      %v1555 = vunpack.c.l.s4 1983009808
      %v1556 = vunpack.c.0.s8 %v1555
      %v1557 = vlaneseq
      %v1558 = vshrl.u32 %v1557, 7
      %v1559 = vsub.s32 %v1556, %v1558
      %v1560 = vrot.slane %v1073, %v1559
      %v1562 = vunpack.c.l.s4 1983009808
      %v1563 = vunpack.c.0.s8 %v1562
      %v1564 = vlaneseq
      %v1565 = vshrl.u32 %v1564, 7
      %v1566 = vsub.s32 %v1563, %v1565
      %v1567 = vrot.slane %v1553, %v1566
      %v1568 = vcombine.high %v1560, %v1560
      %v1569 = vcombine.high %v1567, %v1567
      %v1570 = vcombine.high %v1074, %v1074
      %v1572 = vunpack.c.l.s4 1983009808
      %v1573 = vunpack.c.0.s8 %v1572
      %v1574 = vlaneseq
      %v1575 = vshrl.u32 %v1574, 7
      %v1576 = vsub.s32 %v1573, %v1575
      %v1577 = vrot.slane %v1074, %v1576
      %v1579 = vunpack.c.l.s4 1983009808
      %v1580 = vunpack.c.0.s8 %v1579
      %v1581 = vlaneseq
      %v1582 = vshrl.u32 %v1581, 7
      %v1583 = vsub.s32 %v1580, %v1582
      %v1584 = vrot.slane %v1570, %v1583
      %v1585 = vcombine.high %v1577, %v1577
      %v1586 = vcombine.high %v1584, %v1584
      %v1587 = vcombine.high %v1075, %v1075
      %v1589 = vunpack.c.l.s4 1983009808
      %v1590 = vunpack.c.0.s8 %v1589
      %v1591 = vlaneseq
      %v1592 = vshrl.u32 %v1591, 7
      %v1593 = vsub.s32 %v1590, %v1592
      %v1594 = vrot.slane %v1075, %v1593
      %v1596 = vunpack.c.l.s4 1983009808
      %v1597 = vunpack.c.0.s8 %v1596
      %v1598 = vlaneseq
      %v1599 = vshrl.u32 %v1598, 7
      %v1600 = vsub.s32 %v1597, %v1599
      %v1601 = vrot.slane %v1587, %v1600
      %v1602 = vcombine.high %v1594, %v1594
      %v1603 = vcombine.high %v1601, %v1601
      %v1604 = vcombine.high %v1076, %v1076
      %v1606 = vunpack.c.l.s4 1983009808
      %v1607 = vunpack.c.0.s8 %v1606
      %v1608 = vlaneseq
      %v1609 = vshrl.u32 %v1608, 7
      %v1610 = vsub.s32 %v1607, %v1609
      %v1611 = vrot.slane %v1076, %v1610
      %v1613 = vunpack.c.l.s4 1983009808
      %v1614 = vunpack.c.0.s8 %v1613
      %v1615 = vlaneseq
      %v1616 = vshrl.u32 %v1615, 7
      %v1617 = vsub.s32 %v1614, %v1616
      %v1618 = vrot.slane %v1604, %v1617
      %v1619 = vcombine.high %v1611, %v1611
      %v1620 = vcombine.high %v1618, %v1618
      %v1621 = vcombine.high %v1077, %v1077
      %v1623 = vunpack.c.l.s4 1983009808
      %v1624 = vunpack.c.0.s8 %v1623
      %v1625 = vlaneseq
      %v1626 = vshrl.u32 %v1625, 7
      %v1627 = vsub.s32 %v1624, %v1626
      %v1628 = vrot.slane %v1077, %v1627
      %v1630 = vunpack.c.l.s4 1983009808
      %v1631 = vunpack.c.0.s8 %v1630
      %v1632 = vlaneseq
      %v1633 = vshrl.u32 %v1632, 7
      %v1634 = vsub.s32 %v1631, %v1633
      %v1635 = vrot.slane %v1621, %v1634
      %v1636 = vcombine.high %v1628, %v1628
      %v1637 = vcombine.high %v1635, %v1635
      %v1638 = vcombine.high %v1078, %v1078
      %v1640 = vunpack.c.l.s4 1983009808
      %v1641 = vunpack.c.0.s8 %v1640
      %v1642 = vlaneseq
      %v1643 = vshrl.u32 %v1642, 7
      %v1644 = vsub.s32 %v1641, %v1643
      %v1645 = vrot.slane %v1078, %v1644
      %v1647 = vunpack.c.l.s4 1983009808
      %v1648 = vunpack.c.0.s8 %v1647
      %v1649 = vlaneseq
      %v1650 = vshrl.u32 %v1649, 7
      %v1651 = vsub.s32 %v1648, %v1650
      %v1652 = vrot.slane %v1638, %v1651
      %v1653 = vcombine.high %v1645, %v1645
      %v1654 = vcombine.high %v1652, %v1652
      %vm1783 = vcmask 1041408
      %v1784 = vsel %vm1783, %v1118, -inf
      %v1785 = vrot.slane %v1784, 4
      %v1786 = vmax.f32 %v1784, %v1785
      %v1787 = vrot.slane %v1786, 2
      %v1788 = vmax.f32 %v1786, %v1787
      %v1789 = vrot.slane %v1788, 1
      %v1790 = vmax.f32 %v1788, %v1789
      %v1791 = vsel %vm1783, %v1126, -inf
      %v1792 = vrot.slane %v1791, 4
      %v1793 = vmax.f32 %v1791, %v1792
      %v1794 = vrot.slane %v1793, 2
      %v1795 = vmax.f32 %v1793, %v1794
      %v1796 = vrot.slane %v1795, 1
      %v1797 = vmax.f32 %v1795, %v1796
      %v1798 = vsel %vm1783, %v1125, -inf
      %v1799 = vrot.slane %v1798, 4
      %v1800 = vmax.f32 %v1798, %v1799
      %v1801 = vrot.slane %v1800, 2
      %v1802 = vmax.f32 %v1800, %v1801
      %v1803 = vrot.slane %v1802, 1
      %v1804 = vmax.f32 %v1802, %v1803
      %v1805 = vsel %vm1783, %v1127, -inf
      %v1806 = vrot.slane %v1805, 4
      %v1807 = vmax.f32 %v1805, %v1806
      %v1808 = vrot.slane %v1807, 2
      %v1809 = vmax.f32 %v1807, %v1808
      %v1810 = vrot.slane %v1809, 1
      %v1811 = vmax.f32 %v1809, %v1810
      %v1812 = vsel %vm1783, %v1135, -inf
      %v1813 = vrot.slane %v1812, 4
      %v1814 = vmax.f32 %v1812, %v1813
      %v1815 = vrot.slane %v1814, 2
      %v1816 = vmax.f32 %v1814, %v1815
      %v1817 = vrot.slane %v1816, 1
      %v1818 = vmax.f32 %v1816, %v1817
      %v1819 = vsel %vm1783, %v1143, -inf
      %v1820 = vrot.slane %v1819, 4
      %v1821 = vmax.f32 %v1819, %v1820
      %v1822 = vrot.slane %v1821, 2
      %v1823 = vmax.f32 %v1821, %v1822
      %v1824 = vrot.slane %v1823, 1
      %v1825 = vmax.f32 %v1823, %v1824
      %v1826 = vsel %vm1783, %v1142, -inf
      %v1827 = vrot.slane %v1826, 4
      %v1828 = vmax.f32 %v1826, %v1827
      %v1829 = vrot.slane %v1828, 2
      %v1830 = vmax.f32 %v1828, %v1829
      %v1831 = vrot.slane %v1830, 1
      %v1832 = vmax.f32 %v1830, %v1831
      %v1833 = vsel %vm1783, %v1144, -inf
      %v1834 = vrot.slane %v1833, 4
      %v1835 = vmax.f32 %v1833, %v1834
      %v1836 = vrot.slane %v1835, 2
      %v1837 = vmax.f32 %v1835, %v1836
      %v1838 = vrot.slane %v1837, 1
      %v1839 = vmax.f32 %v1837, %v1838
      %v1840 = vsel %vm1783, %v1152, -inf
      %v1841 = vrot.slane %v1840, 4
      %v1842 = vmax.f32 %v1840, %v1841
      %v1843 = vrot.slane %v1842, 2
      %v1844 = vmax.f32 %v1842, %v1843
      %v1845 = vrot.slane %v1844, 1
      %v1846 = vmax.f32 %v1844, %v1845
      %v1847 = vsel %vm1783, %v1160, -inf
      %v1848 = vrot.slane %v1847, 4
      %v1849 = vmax.f32 %v1847, %v1848
      %v1850 = vrot.slane %v1849, 2
      %v1851 = vmax.f32 %v1849, %v1850
      %v1852 = vrot.slane %v1851, 1
      %v1853 = vmax.f32 %v1851, %v1852
      %v1854 = vsel %vm1783, %v1159, -inf
      %v1855 = vrot.slane %v1854, 4
      %v1856 = vmax.f32 %v1854, %v1855
      %v1857 = vrot.slane %v1856, 2
      %v1858 = vmax.f32 %v1856, %v1857
      %v1859 = vrot.slane %v1858, 1
      %v1860 = vmax.f32 %v1858, %v1859
      %v1861 = vsel %vm1783, %v1161, -inf
      %v1862 = vrot.slane %v1861, 4
      %v1863 = vmax.f32 %v1861, %v1862
      %v1864 = vrot.slane %v1863, 2
      %v1865 = vmax.f32 %v1863, %v1864
      %v1866 = vrot.slane %v1865, 1
      %v1867 = vmax.f32 %v1865, %v1866
      %v1868 = vsel %vm1783, %v1169, -inf
      %v1869 = vrot.slane %v1868, 4
      %v1870 = vmax.f32 %v1868, %v1869
      %v1871 = vrot.slane %v1870, 2
      %v1872 = vmax.f32 %v1870, %v1871
      %v1873 = vrot.slane %v1872, 1
      %v1874 = vmax.f32 %v1872, %v1873
      %v1875 = vsel %vm1783, %v1177, -inf
      %v1876 = vrot.slane %v1875, 4
      %v1877 = vmax.f32 %v1875, %v1876
      %v1878 = vrot.slane %v1877, 2
      %v1879 = vmax.f32 %v1877, %v1878
      %v1880 = vrot.slane %v1879, 1
      %v1881 = vmax.f32 %v1879, %v1880
      %v1882 = vsel %vm1783, %v1176, -inf
      %v1883 = vrot.slane %v1882, 4
      %v1884 = vmax.f32 %v1882, %v1883
      %v1885 = vrot.slane %v1884, 2
      %v1886 = vmax.f32 %v1884, %v1885
      %v1887 = vrot.slane %v1886, 1
      %v1888 = vmax.f32 %v1886, %v1887
      %v1889 = vsel %vm1783, %v1178, -inf
      %v1890 = vrot.slane %v1889, 4
      %v1891 = vmax.f32 %v1889, %v1890
      %v1892 = vrot.slane %v1891, 2
      %v1893 = vmax.f32 %v1891, %v1892
      %v1894 = vrot.slane %v1893, 1
      %v1895 = vmax.f32 %v1893, %v1894
      %v1896 = vsel %vm1783, %v1186, -inf
      %v1897 = vrot.slane %v1896, 4
      %v1898 = vmax.f32 %v1896, %v1897
      %v1899 = vrot.slane %v1898, 2
      %v1900 = vmax.f32 %v1898, %v1899
      %v1901 = vrot.slane %v1900, 1
      %v1902 = vmax.f32 %v1900, %v1901
      %v1903 = vsel %vm1783, %v1194, -inf
      %v1904 = vrot.slane %v1903, 4
      %v1905 = vmax.f32 %v1903, %v1904
      %v1906 = vrot.slane %v1905, 2
      %v1907 = vmax.f32 %v1905, %v1906
      %v1908 = vrot.slane %v1907, 1
      %v1909 = vmax.f32 %v1907, %v1908
      %v1910 = vsel %vm1783, %v1193, -inf
      %v1911 = vrot.slane %v1910, 4
      %v1912 = vmax.f32 %v1910, %v1911
      %v1913 = vrot.slane %v1912, 2
      %v1914 = vmax.f32 %v1912, %v1913
      %v1915 = vrot.slane %v1914, 1
      %v1916 = vmax.f32 %v1914, %v1915
      %v1917 = vsel %vm1783, %v1195, -inf
      %v1918 = vrot.slane %v1917, 4
      %v1919 = vmax.f32 %v1917, %v1918
      %v1920 = vrot.slane %v1919, 2
      %v1921 = vmax.f32 %v1919, %v1920
      %v1922 = vrot.slane %v1921, 1
      %v1923 = vmax.f32 %v1921, %v1922
      %v1924 = vsel %vm1783, %v1203, -inf
      %v1925 = vrot.slane %v1924, 4
      %v1926 = vmax.f32 %v1924, %v1925
      %v1927 = vrot.slane %v1926, 2
      %v1928 = vmax.f32 %v1926, %v1927
      %v1929 = vrot.slane %v1928, 1
      %v1930 = vmax.f32 %v1928, %v1929
      %v1931 = vsel %vm1783, %v1211, -inf
      %v1932 = vrot.slane %v1931, 4
      %v1933 = vmax.f32 %v1931, %v1932
      %v1934 = vrot.slane %v1933, 2
      %v1935 = vmax.f32 %v1933, %v1934
      %v1936 = vrot.slane %v1935, 1
      %v1937 = vmax.f32 %v1935, %v1936
      %v1938 = vsel %vm1783, %v1210, -inf
      %v1939 = vrot.slane %v1938, 4
      %v1940 = vmax.f32 %v1938, %v1939
      %v1941 = vrot.slane %v1940, 2
      %v1942 = vmax.f32 %v1940, %v1941
      %v1943 = vrot.slane %v1942, 1
      %v1944 = vmax.f32 %v1942, %v1943
      %v1945 = vsel %vm1783, %v1212, -inf
      %v1946 = vrot.slane %v1945, 4
      %v1947 = vmax.f32 %v1945, %v1946
      %v1948 = vrot.slane %v1947, 2
      %v1949 = vmax.f32 %v1947, %v1948
      %v1950 = vrot.slane %v1949, 1
      %v1951 = vmax.f32 %v1949, %v1950
      %v1952 = vsel %vm1783, %v1220, -inf
      %v1953 = vrot.slane %v1952, 4
      %v1954 = vmax.f32 %v1952, %v1953
      %v1955 = vrot.slane %v1954, 2
      %v1956 = vmax.f32 %v1954, %v1955
      %v1957 = vrot.slane %v1956, 1
      %v1958 = vmax.f32 %v1956, %v1957
      %v1959 = vsel %vm1783, %v1228, -inf
      %v1960 = vrot.slane %v1959, 4
      %v1961 = vmax.f32 %v1959, %v1960
      %v1962 = vrot.slane %v1961, 2
      %v1963 = vmax.f32 %v1961, %v1962
      %v1964 = vrot.slane %v1963, 1
      %v1965 = vmax.f32 %v1963, %v1964
      %v1966 = vsel %vm1783, %v1227, -inf
      %v1967 = vrot.slane %v1966, 4
      %v1968 = vmax.f32 %v1966, %v1967
      %v1969 = vrot.slane %v1968, 2
      %v1970 = vmax.f32 %v1968, %v1969
      %v1971 = vrot.slane %v1970, 1
      %v1972 = vmax.f32 %v1970, %v1971
      %v1973 = vsel %vm1783, %v1229, -inf
      %v1974 = vrot.slane %v1973, 4
      %v1975 = vmax.f32 %v1973, %v1974
      %v1976 = vrot.slane %v1975, 2
      %v1977 = vmax.f32 %v1975, %v1976
      %v1978 = vrot.slane %v1977, 1
      %v1979 = vmax.f32 %v1977, %v1978
      %v1980 = vsel %vm1783, %v1237, -inf
      %v1981 = vrot.slane %v1980, 4
      %v1982 = vmax.f32 %v1980, %v1981
      %v1983 = vrot.slane %v1982, 2
      %v1984 = vmax.f32 %v1982, %v1983
      %v1985 = vrot.slane %v1984, 1
      %v1986 = vmax.f32 %v1984, %v1985
      %v1987 = vsel %vm1783, %v1245, -inf
      %v1988 = vrot.slane %v1987, 4
      %v1989 = vmax.f32 %v1987, %v1988
      %v1990 = vrot.slane %v1989, 2
      %v1991 = vmax.f32 %v1989, %v1990
      %v1992 = vrot.slane %v1991, 1
      %v1993 = vmax.f32 %v1991, %v1992
      %v1994 = vsel %vm1783, %v1244, -inf
      %v1995 = vrot.slane %v1994, 4
      %v1996 = vmax.f32 %v1994, %v1995
      %v1997 = vrot.slane %v1996, 2
      %v1998 = vmax.f32 %v1996, %v1997
      %v1999 = vrot.slane %v1998, 1
      %v2000 = vmax.f32 %v1998, %v1999
      %v2001 = vsel %vm1783, %v1246, -inf
      %v2002 = vrot.slane %v2001, 4
      %v2003 = vmax.f32 %v2001, %v2002
      %v2004 = vrot.slane %v2003, 2
      %v2005 = vmax.f32 %v2003, %v2004
      %v2006 = vrot.slane %v2005, 1
      %v2007 = vmax.f32 %v2005, %v2006
      %v2008 = vsel %vm1783, %v1254, -inf
      %v2009 = vrot.slane %v2008, 4
      %v2010 = vmax.f32 %v2008, %v2009
      %v2011 = vrot.slane %v2010, 2
      %v2012 = vmax.f32 %v2010, %v2011
      %v2013 = vrot.slane %v2012, 1
      %v2014 = vmax.f32 %v2012, %v2013
      %v2015 = vsel %vm1783, %v1262, -inf
      %v2016 = vrot.slane %v2015, 4
      %v2017 = vmax.f32 %v2015, %v2016
      %v2018 = vrot.slane %v2017, 2
      %v2019 = vmax.f32 %v2017, %v2018
      %v2020 = vrot.slane %v2019, 1
      %v2021 = vmax.f32 %v2019, %v2020
      %v2022 = vsel %vm1783, %v1261, -inf
      %v2023 = vrot.slane %v2022, 4
      %v2024 = vmax.f32 %v2022, %v2023
      %v2025 = vrot.slane %v2024, 2
      %v2026 = vmax.f32 %v2024, %v2025
      %v2027 = vrot.slane %v2026, 1
      %v2028 = vmax.f32 %v2026, %v2027
      %v2029 = vsel %vm1783, %v1263, -inf
      %v2030 = vrot.slane %v2029, 4
      %v2031 = vmax.f32 %v2029, %v2030
      %v2032 = vrot.slane %v2031, 2
      %v2033 = vmax.f32 %v2031, %v2032
      %v2034 = vrot.slane %v2033, 1
      %v2035 = vmax.f32 %v2033, %v2034
      %v2036 = vsel %vm1783, %v1271, -inf
      %v2037 = vrot.slane %v2036, 4
      %v2038 = vmax.f32 %v2036, %v2037
      %v2039 = vrot.slane %v2038, 2
      %v2040 = vmax.f32 %v2038, %v2039
      %v2041 = vrot.slane %v2040, 1
      %v2042 = vmax.f32 %v2040, %v2041
      %v2043 = vsel %vm1783, %v1279, -inf
      %v2044 = vrot.slane %v2043, 4
      %v2045 = vmax.f32 %v2043, %v2044
      %v2046 = vrot.slane %v2045, 2
      %v2047 = vmax.f32 %v2045, %v2046
      %v2048 = vrot.slane %v2047, 1
      %v2049 = vmax.f32 %v2047, %v2048
      %v2050 = vsel %vm1783, %v1278, -inf
      %v2051 = vrot.slane %v2050, 4
      %v2052 = vmax.f32 %v2050, %v2051
      %v2053 = vrot.slane %v2052, 2
      %v2054 = vmax.f32 %v2052, %v2053
      %v2055 = vrot.slane %v2054, 1
      %v2056 = vmax.f32 %v2054, %v2055
      %v2057 = vsel %vm1783, %v1280, -inf
      %v2058 = vrot.slane %v2057, 4
      %v2059 = vmax.f32 %v2057, %v2058
      %v2060 = vrot.slane %v2059, 2
      %v2061 = vmax.f32 %v2059, %v2060
      %v2062 = vrot.slane %v2061, 1
      %v2063 = vmax.f32 %v2061, %v2062
      %v2064 = vsel %vm1783, %v1288, -inf
      %v2065 = vrot.slane %v2064, 4
      %v2066 = vmax.f32 %v2064, %v2065
      %v2067 = vrot.slane %v2066, 2
      %v2068 = vmax.f32 %v2066, %v2067
      %v2069 = vrot.slane %v2068, 1
      %v2070 = vmax.f32 %v2068, %v2069
      %v2071 = vsel %vm1783, %v1296, -inf
      %v2072 = vrot.slane %v2071, 4
      %v2073 = vmax.f32 %v2071, %v2072
      %v2074 = vrot.slane %v2073, 2
      %v2075 = vmax.f32 %v2073, %v2074
      %v2076 = vrot.slane %v2075, 1
      %v2077 = vmax.f32 %v2075, %v2076
      %v2078 = vsel %vm1783, %v1295, -inf
      %v2079 = vrot.slane %v2078, 4
      %v2080 = vmax.f32 %v2078, %v2079
      %v2081 = vrot.slane %v2080, 2
      %v2082 = vmax.f32 %v2080, %v2081
      %v2083 = vrot.slane %v2082, 1
      %v2084 = vmax.f32 %v2082, %v2083
      %v2085 = vsel %vm1783, %v1297, -inf
      %v2086 = vrot.slane %v2085, 4
      %v2087 = vmax.f32 %v2085, %v2086
      %v2088 = vrot.slane %v2087, 2
      %v2089 = vmax.f32 %v2087, %v2088
      %v2090 = vrot.slane %v2089, 1
      %v2091 = vmax.f32 %v2089, %v2090
      %v2092 = vsel %vm1783, %v1305, -inf
      %v2093 = vrot.slane %v2092, 4
      %v2094 = vmax.f32 %v2092, %v2093
      %v2095 = vrot.slane %v2094, 2
      %v2096 = vmax.f32 %v2094, %v2095
      %v2097 = vrot.slane %v2096, 1
      %v2098 = vmax.f32 %v2096, %v2097
      %v2099 = vsel %vm1783, %v1313, -inf
      %v2100 = vrot.slane %v2099, 4
      %v2101 = vmax.f32 %v2099, %v2100
      %v2102 = vrot.slane %v2101, 2
      %v2103 = vmax.f32 %v2101, %v2102
      %v2104 = vrot.slane %v2103, 1
      %v2105 = vmax.f32 %v2103, %v2104
      %v2106 = vsel %vm1783, %v1312, -inf
      %v2107 = vrot.slane %v2106, 4
      %v2108 = vmax.f32 %v2106, %v2107
      %v2109 = vrot.slane %v2108, 2
      %v2110 = vmax.f32 %v2108, %v2109
      %v2111 = vrot.slane %v2110, 1
      %v2112 = vmax.f32 %v2110, %v2111
      %v2113 = vsel %vm1783, %v1314, -inf
      %v2114 = vrot.slane %v2113, 4
      %v2115 = vmax.f32 %v2113, %v2114
      %v2116 = vrot.slane %v2115, 2
      %v2117 = vmax.f32 %v2115, %v2116
      %v2118 = vrot.slane %v2117, 1
      %v2119 = vmax.f32 %v2117, %v2118
      %v2120 = vsel %vm1783, %v1322, -inf
      %v2121 = vrot.slane %v2120, 4
      %v2122 = vmax.f32 %v2120, %v2121
      %v2123 = vrot.slane %v2122, 2
      %v2124 = vmax.f32 %v2122, %v2123
      %v2125 = vrot.slane %v2124, 1
      %v2126 = vmax.f32 %v2124, %v2125
      %v2127 = vsel %vm1783, %v1330, -inf
      %v2128 = vrot.slane %v2127, 4
      %v2129 = vmax.f32 %v2127, %v2128
      %v2130 = vrot.slane %v2129, 2
      %v2131 = vmax.f32 %v2129, %v2130
      %v2132 = vrot.slane %v2131, 1
      %v2133 = vmax.f32 %v2131, %v2132
      %v2134 = vsel %vm1783, %v1329, -inf
      %v2135 = vrot.slane %v2134, 4
      %v2136 = vmax.f32 %v2134, %v2135
      %v2137 = vrot.slane %v2136, 2
      %v2138 = vmax.f32 %v2136, %v2137
      %v2139 = vrot.slane %v2138, 1
      %v2140 = vmax.f32 %v2138, %v2139
      %v2141 = vsel %vm1783, %v1331, -inf
      %v2142 = vrot.slane %v2141, 4
      %v2143 = vmax.f32 %v2141, %v2142
      %v2144 = vrot.slane %v2143, 2
      %v2145 = vmax.f32 %v2143, %v2144
      %v2146 = vrot.slane %v2145, 1
      %v2147 = vmax.f32 %v2145, %v2146
      %v2148 = vsel %vm1783, %v1339, -inf
      %v2149 = vrot.slane %v2148, 4
      %v2150 = vmax.f32 %v2148, %v2149
      %v2151 = vrot.slane %v2150, 2
      %v2152 = vmax.f32 %v2150, %v2151
      %v2153 = vrot.slane %v2152, 1
      %v2154 = vmax.f32 %v2152, %v2153
      %v2155 = vsel %vm1783, %v1347, -inf
      %v2156 = vrot.slane %v2155, 4
      %v2157 = vmax.f32 %v2155, %v2156
      %v2158 = vrot.slane %v2157, 2
      %v2159 = vmax.f32 %v2157, %v2158
      %v2160 = vrot.slane %v2159, 1
      %v2161 = vmax.f32 %v2159, %v2160
      %v2162 = vsel %vm1783, %v1346, -inf
      %v2163 = vrot.slane %v2162, 4
      %v2164 = vmax.f32 %v2162, %v2163
      %v2165 = vrot.slane %v2164, 2
      %v2166 = vmax.f32 %v2164, %v2165
      %v2167 = vrot.slane %v2166, 1
      %v2168 = vmax.f32 %v2166, %v2167
      %v2169 = vsel %vm1783, %v1348, -inf
      %v2170 = vrot.slane %v2169, 4
      %v2171 = vmax.f32 %v2169, %v2170
      %v2172 = vrot.slane %v2171, 2
      %v2173 = vmax.f32 %v2171, %v2172
      %v2174 = vrot.slane %v2173, 1
      %v2175 = vmax.f32 %v2173, %v2174
      %v2176 = vsel %vm1783, %v1356, -inf
      %v2177 = vrot.slane %v2176, 4
      %v2178 = vmax.f32 %v2176, %v2177
      %v2179 = vrot.slane %v2178, 2
      %v2180 = vmax.f32 %v2178, %v2179
      %v2181 = vrot.slane %v2180, 1
      %v2182 = vmax.f32 %v2180, %v2181
      %v2183 = vsel %vm1783, %v1364, -inf
      %v2184 = vrot.slane %v2183, 4
      %v2185 = vmax.f32 %v2183, %v2184
      %v2186 = vrot.slane %v2185, 2
      %v2187 = vmax.f32 %v2185, %v2186
      %v2188 = vrot.slane %v2187, 1
      %v2189 = vmax.f32 %v2187, %v2188
      %v2190 = vsel %vm1783, %v1363, -inf
      %v2191 = vrot.slane %v2190, 4
      %v2192 = vmax.f32 %v2190, %v2191
      %v2193 = vrot.slane %v2192, 2
      %v2194 = vmax.f32 %v2192, %v2193
      %v2195 = vrot.slane %v2194, 1
      %v2196 = vmax.f32 %v2194, %v2195
      %v2197 = vsel %vm1783, %v1365, -inf
      %v2198 = vrot.slane %v2197, 4
      %v2199 = vmax.f32 %v2197, %v2198
      %v2200 = vrot.slane %v2199, 2
      %v2201 = vmax.f32 %v2199, %v2200
      %v2202 = vrot.slane %v2201, 1
      %v2203 = vmax.f32 %v2201, %v2202
      %v2204 = vsel %vm1783, %v1373, -inf
      %v2205 = vrot.slane %v2204, 4
      %v2206 = vmax.f32 %v2204, %v2205
      %v2207 = vrot.slane %v2206, 2
      %v2208 = vmax.f32 %v2206, %v2207
      %v2209 = vrot.slane %v2208, 1
      %v2210 = vmax.f32 %v2208, %v2209
      %v2211 = vsel %vm1783, %v1381, -inf
      %v2212 = vrot.slane %v2211, 4
      %v2213 = vmax.f32 %v2211, %v2212
      %v2214 = vrot.slane %v2213, 2
      %v2215 = vmax.f32 %v2213, %v2214
      %v2216 = vrot.slane %v2215, 1
      %v2217 = vmax.f32 %v2215, %v2216
      %v2218 = vsel %vm1783, %v1380, -inf
      %v2219 = vrot.slane %v2218, 4
      %v2220 = vmax.f32 %v2218, %v2219
      %v2221 = vrot.slane %v2220, 2
      %v2222 = vmax.f32 %v2220, %v2221
      %v2223 = vrot.slane %v2222, 1
      %v2224 = vmax.f32 %v2222, %v2223
      %v2225 = vsel %vm1783, %v1382, -inf
      %v2226 = vrot.slane %v2225, 4
      %v2227 = vmax.f32 %v2225, %v2226
      %v2228 = vrot.slane %v2227, 2
      %v2229 = vmax.f32 %v2227, %v2228
      %v2230 = vrot.slane %v2229, 1
      %v2231 = vmax.f32 %v2229, %v2230
      %v2232 = vsel %vm1783, %v1390, -inf
      %v2233 = vrot.slane %v2232, 4
      %v2234 = vmax.f32 %v2232, %v2233
      %v2235 = vrot.slane %v2234, 2
      %v2236 = vmax.f32 %v2234, %v2235
      %v2237 = vrot.slane %v2236, 1
      %v2238 = vmax.f32 %v2236, %v2237
      %v2239 = vsel %vm1783, %v1398, -inf
      %v2240 = vrot.slane %v2239, 4
      %v2241 = vmax.f32 %v2239, %v2240
      %v2242 = vrot.slane %v2241, 2
      %v2243 = vmax.f32 %v2241, %v2242
      %v2244 = vrot.slane %v2243, 1
      %v2245 = vmax.f32 %v2243, %v2244
      %v2246 = vsel %vm1783, %v1397, -inf
      %v2247 = vrot.slane %v2246, 4
      %v2248 = vmax.f32 %v2246, %v2247
      %v2249 = vrot.slane %v2248, 2
      %v2250 = vmax.f32 %v2248, %v2249
      %v2251 = vrot.slane %v2250, 1
      %v2252 = vmax.f32 %v2250, %v2251
      %v2253 = vsel %vm1783, %v1399, -inf
      %v2254 = vrot.slane %v2253, 4
      %v2255 = vmax.f32 %v2253, %v2254
      %v2256 = vrot.slane %v2255, 2
      %v2257 = vmax.f32 %v2255, %v2256
      %v2258 = vrot.slane %v2257, 1
      %v2259 = vmax.f32 %v2257, %v2258
      %v2260 = vsel %vm1783, %v1407, -inf
      %v2261 = vrot.slane %v2260, 4
      %v2262 = vmax.f32 %v2260, %v2261
      %v2263 = vrot.slane %v2262, 2
      %v2264 = vmax.f32 %v2262, %v2263
      %v2265 = vrot.slane %v2264, 1
      %v2266 = vmax.f32 %v2264, %v2265
      %v2267 = vsel %vm1783, %v1415, -inf
      %v2268 = vrot.slane %v2267, 4
      %v2269 = vmax.f32 %v2267, %v2268
      %v2270 = vrot.slane %v2269, 2
      %v2271 = vmax.f32 %v2269, %v2270
      %v2272 = vrot.slane %v2271, 1
      %v2273 = vmax.f32 %v2271, %v2272
      %v2274 = vsel %vm1783, %v1414, -inf
      %v2275 = vrot.slane %v2274, 4
      %v2276 = vmax.f32 %v2274, %v2275
      %v2277 = vrot.slane %v2276, 2
      %v2278 = vmax.f32 %v2276, %v2277
      %v2279 = vrot.slane %v2278, 1
      %v2280 = vmax.f32 %v2278, %v2279
      %v2281 = vsel %vm1783, %v1416, -inf
      %v2282 = vrot.slane %v2281, 4
      %v2283 = vmax.f32 %v2281, %v2282
      %v2284 = vrot.slane %v2283, 2
      %v2285 = vmax.f32 %v2283, %v2284
      %v2286 = vrot.slane %v2285, 1
      %v2287 = vmax.f32 %v2285, %v2286
      %v2288 = vsel %vm1783, %v1424, -inf
      %v2289 = vrot.slane %v2288, 4
      %v2290 = vmax.f32 %v2288, %v2289
      %v2291 = vrot.slane %v2290, 2
      %v2292 = vmax.f32 %v2290, %v2291
      %v2293 = vrot.slane %v2292, 1
      %v2294 = vmax.f32 %v2292, %v2293
      %v2295 = vsel %vm1783, %v1432, -inf
      %v2296 = vrot.slane %v2295, 4
      %v2297 = vmax.f32 %v2295, %v2296
      %v2298 = vrot.slane %v2297, 2
      %v2299 = vmax.f32 %v2297, %v2298
      %v2300 = vrot.slane %v2299, 1
      %v2301 = vmax.f32 %v2299, %v2300
      %v2302 = vsel %vm1783, %v1431, -inf
      %v2303 = vrot.slane %v2302, 4
      %v2304 = vmax.f32 %v2302, %v2303
      %v2305 = vrot.slane %v2304, 2
      %v2306 = vmax.f32 %v2304, %v2305
      %v2307 = vrot.slane %v2306, 1
      %v2308 = vmax.f32 %v2306, %v2307
      %v2309 = vsel %vm1783, %v1433, -inf
      %v2310 = vrot.slane %v2309, 4
      %v2311 = vmax.f32 %v2309, %v2310
      %v2312 = vrot.slane %v2311, 2
      %v2313 = vmax.f32 %v2311, %v2312
      %v2314 = vrot.slane %v2313, 1
      %v2315 = vmax.f32 %v2313, %v2314
      %v2316 = vsel %vm1783, %v1441, -inf
      %v2317 = vrot.slane %v2316, 4
      %v2318 = vmax.f32 %v2316, %v2317
      %v2319 = vrot.slane %v2318, 2
      %v2320 = vmax.f32 %v2318, %v2319
      %v2321 = vrot.slane %v2320, 1
      %v2322 = vmax.f32 %v2320, %v2321
      %v2323 = vsel %vm1783, %v1449, -inf
      %v2324 = vrot.slane %v2323, 4
      %v2325 = vmax.f32 %v2323, %v2324
      %v2326 = vrot.slane %v2325, 2
      %v2327 = vmax.f32 %v2325, %v2326
      %v2328 = vrot.slane %v2327, 1
      %v2329 = vmax.f32 %v2327, %v2328
      %v2330 = vsel %vm1783, %v1448, -inf
      %v2331 = vrot.slane %v2330, 4
      %v2332 = vmax.f32 %v2330, %v2331
      %v2333 = vrot.slane %v2332, 2
      %v2334 = vmax.f32 %v2332, %v2333
      %v2335 = vrot.slane %v2334, 1
      %v2336 = vmax.f32 %v2334, %v2335
      %v2337 = vsel %vm1783, %v1450, -inf
      %v2338 = vrot.slane %v2337, 4
      %v2339 = vmax.f32 %v2337, %v2338
      %v2340 = vrot.slane %v2339, 2
      %v2341 = vmax.f32 %v2339, %v2340
      %v2342 = vrot.slane %v2341, 1
      %v2343 = vmax.f32 %v2341, %v2342
      %v2344 = vsel %vm1783, %v1458, -inf
      %v2345 = vrot.slane %v2344, 4
      %v2346 = vmax.f32 %v2344, %v2345
      %v2347 = vrot.slane %v2346, 2
      %v2348 = vmax.f32 %v2346, %v2347
      %v2349 = vrot.slane %v2348, 1
      %v2350 = vmax.f32 %v2348, %v2349
      %v2351 = vsel %vm1783, %v1466, -inf
      %v2352 = vrot.slane %v2351, 4
      %v2353 = vmax.f32 %v2351, %v2352
      %v2354 = vrot.slane %v2353, 2
      %v2355 = vmax.f32 %v2353, %v2354
      %v2356 = vrot.slane %v2355, 1
      %v2357 = vmax.f32 %v2355, %v2356
      %v2358 = vsel %vm1783, %v1465, -inf
      %v2359 = vrot.slane %v2358, 4
      %v2360 = vmax.f32 %v2358, %v2359
      %v2361 = vrot.slane %v2360, 2
      %v2362 = vmax.f32 %v2360, %v2361
      %v2363 = vrot.slane %v2362, 1
      %v2364 = vmax.f32 %v2362, %v2363
      %v2365 = vsel %vm1783, %v1467, -inf
      %v2366 = vrot.slane %v2365, 4
      %v2367 = vmax.f32 %v2365, %v2366
      %v2368 = vrot.slane %v2367, 2
      %v2369 = vmax.f32 %v2367, %v2368
      %v2370 = vrot.slane %v2369, 1
      %v2371 = vmax.f32 %v2369, %v2370
      %v2372 = vsel %vm1783, %v1475, -inf
      %v2373 = vrot.slane %v2372, 4
      %v2374 = vmax.f32 %v2372, %v2373
      %v2375 = vrot.slane %v2374, 2
      %v2376 = vmax.f32 %v2374, %v2375
      %v2377 = vrot.slane %v2376, 1
      %v2378 = vmax.f32 %v2376, %v2377
      %v2379 = vsel %vm1783, %v1483, -inf
      %v2380 = vrot.slane %v2379, 4
      %v2381 = vmax.f32 %v2379, %v2380
      %v2382 = vrot.slane %v2381, 2
      %v2383 = vmax.f32 %v2381, %v2382
      %v2384 = vrot.slane %v2383, 1
      %v2385 = vmax.f32 %v2383, %v2384
      %v2386 = vsel %vm1783, %v1482, -inf
      %v2387 = vrot.slane %v2386, 4
      %v2388 = vmax.f32 %v2386, %v2387
      %v2389 = vrot.slane %v2388, 2
      %v2390 = vmax.f32 %v2388, %v2389
      %v2391 = vrot.slane %v2390, 1
      %v2392 = vmax.f32 %v2390, %v2391
      %v2393 = vsel %vm1783, %v1484, -inf
      %v2394 = vrot.slane %v2393, 4
      %v2395 = vmax.f32 %v2393, %v2394
      %v2396 = vrot.slane %v2395, 2
      %v2397 = vmax.f32 %v2395, %v2396
      %v2398 = vrot.slane %v2397, 1
      %v2399 = vmax.f32 %v2397, %v2398
      %v2400 = vsel %vm1783, %v1492, -inf
      %v2401 = vrot.slane %v2400, 4
      %v2402 = vmax.f32 %v2400, %v2401
      %v2403 = vrot.slane %v2402, 2
      %v2404 = vmax.f32 %v2402, %v2403
      %v2405 = vrot.slane %v2404, 1
      %v2406 = vmax.f32 %v2404, %v2405
      %v2407 = vsel %vm1783, %v1500, -inf
      %v2408 = vrot.slane %v2407, 4
      %v2409 = vmax.f32 %v2407, %v2408
      %v2410 = vrot.slane %v2409, 2
      %v2411 = vmax.f32 %v2409, %v2410
      %v2412 = vrot.slane %v2411, 1
      %v2413 = vmax.f32 %v2411, %v2412
      %v2414 = vsel %vm1783, %v1499, -inf
      %v2415 = vrot.slane %v2414, 4
      %v2416 = vmax.f32 %v2414, %v2415
      %v2417 = vrot.slane %v2416, 2
      %v2418 = vmax.f32 %v2416, %v2417
      %v2419 = vrot.slane %v2418, 1
      %v2420 = vmax.f32 %v2418, %v2419
      %v2421 = vsel %vm1783, %v1501, -inf
      %v2422 = vrot.slane %v2421, 4
      %v2423 = vmax.f32 %v2421, %v2422
      %v2424 = vrot.slane %v2423, 2
      %v2425 = vmax.f32 %v2423, %v2424
      %v2426 = vrot.slane %v2425, 1
      %v2427 = vmax.f32 %v2425, %v2426
      %v2428 = vsel %vm1783, %v1509, -inf
      %v2429 = vrot.slane %v2428, 4
      %v2430 = vmax.f32 %v2428, %v2429
      %v2431 = vrot.slane %v2430, 2
      %v2432 = vmax.f32 %v2430, %v2431
      %v2433 = vrot.slane %v2432, 1
      %v2434 = vmax.f32 %v2432, %v2433
      %v2435 = vsel %vm1783, %v1517, -inf
      %v2436 = vrot.slane %v2435, 4
      %v2437 = vmax.f32 %v2435, %v2436
      %v2438 = vrot.slane %v2437, 2
      %v2439 = vmax.f32 %v2437, %v2438
      %v2440 = vrot.slane %v2439, 1
      %v2441 = vmax.f32 %v2439, %v2440
      %v2442 = vsel %vm1783, %v1516, -inf
      %v2443 = vrot.slane %v2442, 4
      %v2444 = vmax.f32 %v2442, %v2443
      %v2445 = vrot.slane %v2444, 2
      %v2446 = vmax.f32 %v2444, %v2445
      %v2447 = vrot.slane %v2446, 1
      %v2448 = vmax.f32 %v2446, %v2447
      %v2449 = vsel %vm1783, %v1518, -inf
      %v2450 = vrot.slane %v2449, 4
      %v2451 = vmax.f32 %v2449, %v2450
      %v2452 = vrot.slane %v2451, 2
      %v2453 = vmax.f32 %v2451, %v2452
      %v2454 = vrot.slane %v2453, 1
      %v2455 = vmax.f32 %v2453, %v2454
      %v2456 = vsel %vm1783, %v1526, -inf
      %v2457 = vrot.slane %v2456, 4
      %v2458 = vmax.f32 %v2456, %v2457
      %v2459 = vrot.slane %v2458, 2
      %v2460 = vmax.f32 %v2458, %v2459
      %v2461 = vrot.slane %v2460, 1
      %v2462 = vmax.f32 %v2460, %v2461
      %v2463 = vsel %vm1783, %v1534, -inf
      %v2464 = vrot.slane %v2463, 4
      %v2465 = vmax.f32 %v2463, %v2464
      %v2466 = vrot.slane %v2465, 2
      %v2467 = vmax.f32 %v2465, %v2466
      %v2468 = vrot.slane %v2467, 1
      %v2469 = vmax.f32 %v2467, %v2468
      %v2470 = vsel %vm1783, %v1533, -inf
      %v2471 = vrot.slane %v2470, 4
      %v2472 = vmax.f32 %v2470, %v2471
      %v2473 = vrot.slane %v2472, 2
      %v2474 = vmax.f32 %v2472, %v2473
      %v2475 = vrot.slane %v2474, 1
      %v2476 = vmax.f32 %v2474, %v2475
      %v2477 = vsel %vm1783, %v1535, -inf
      %v2478 = vrot.slane %v2477, 4
      %v2479 = vmax.f32 %v2477, %v2478
      %v2480 = vrot.slane %v2479, 2
      %v2481 = vmax.f32 %v2479, %v2480
      %v2482 = vrot.slane %v2481, 1
      %v2483 = vmax.f32 %v2481, %v2482
      %v2484 = vsel %vm1783, %v1543, -inf
      %v2485 = vrot.slane %v2484, 4
      %v2486 = vmax.f32 %v2484, %v2485
      %v2487 = vrot.slane %v2486, 2
      %v2488 = vmax.f32 %v2486, %v2487
      %v2489 = vrot.slane %v2488, 1
      %v2490 = vmax.f32 %v2488, %v2489
      %v2491 = vsel %vm1783, %v1551, -inf
      %v2492 = vrot.slane %v2491, 4
      %v2493 = vmax.f32 %v2491, %v2492
      %v2494 = vrot.slane %v2493, 2
      %v2495 = vmax.f32 %v2493, %v2494
      %v2496 = vrot.slane %v2495, 1
      %v2497 = vmax.f32 %v2495, %v2496
      %v2498 = vsel %vm1783, %v1550, -inf
      %v2499 = vrot.slane %v2498, 4
      %v2500 = vmax.f32 %v2498, %v2499
      %v2501 = vrot.slane %v2500, 2
      %v2502 = vmax.f32 %v2500, %v2501
      %v2503 = vrot.slane %v2502, 1
      %v2504 = vmax.f32 %v2502, %v2503
      %v2505 = vsel %vm1783, %v1552, -inf
      %v2506 = vrot.slane %v2505, 4
      %v2507 = vmax.f32 %v2505, %v2506
      %v2508 = vrot.slane %v2507, 2
      %v2509 = vmax.f32 %v2507, %v2508
      %v2510 = vrot.slane %v2509, 1
      %v2511 = vmax.f32 %v2509, %v2510
      %v2512 = vsel %vm1783, %v1560, -inf
      %v2513 = vrot.slane %v2512, 4
      %v2514 = vmax.f32 %v2512, %v2513
      %v2515 = vrot.slane %v2514, 2
      %v2516 = vmax.f32 %v2514, %v2515
      %v2517 = vrot.slane %v2516, 1
      %v2518 = vmax.f32 %v2516, %v2517
      %v2519 = vsel %vm1783, %v1568, -inf
      %v2520 = vrot.slane %v2519, 4
      %v2521 = vmax.f32 %v2519, %v2520
      %v2522 = vrot.slane %v2521, 2
      %v2523 = vmax.f32 %v2521, %v2522
      %v2524 = vrot.slane %v2523, 1
      %v2525 = vmax.f32 %v2523, %v2524
      %v2526 = vsel %vm1783, %v1567, -inf
      %v2527 = vrot.slane %v2526, 4
      %v2528 = vmax.f32 %v2526, %v2527
      %v2529 = vrot.slane %v2528, 2
      %v2530 = vmax.f32 %v2528, %v2529
      %v2531 = vrot.slane %v2530, 1
      %v2532 = vmax.f32 %v2530, %v2531
      %v2533 = vsel %vm1783, %v1569, -inf
      %v2534 = vrot.slane %v2533, 4
      %v2535 = vmax.f32 %v2533, %v2534
      %v2536 = vrot.slane %v2535, 2
      %v2537 = vmax.f32 %v2535, %v2536
      %v2538 = vrot.slane %v2537, 1
      %v2539 = vmax.f32 %v2537, %v2538
      %v2540 = vsel %vm1783, %v1577, -inf
      %v2541 = vrot.slane %v2540, 4
      %v2542 = vmax.f32 %v2540, %v2541
      %v2543 = vrot.slane %v2542, 2
      %v2544 = vmax.f32 %v2542, %v2543
      %v2545 = vrot.slane %v2544, 1
      %v2546 = vmax.f32 %v2544, %v2545
      %v2547 = vsel %vm1783, %v1585, -inf
      %v2548 = vrot.slane %v2547, 4
      %v2549 = vmax.f32 %v2547, %v2548
      %v2550 = vrot.slane %v2549, 2
      %v2551 = vmax.f32 %v2549, %v2550
      %v2552 = vrot.slane %v2551, 1
      %v2553 = vmax.f32 %v2551, %v2552
      %v2554 = vsel %vm1783, %v1584, -inf
      %v2555 = vrot.slane %v2554, 4
      %v2556 = vmax.f32 %v2554, %v2555
      %v2557 = vrot.slane %v2556, 2
      %v2558 = vmax.f32 %v2556, %v2557
      %v2559 = vrot.slane %v2558, 1
      %v2560 = vmax.f32 %v2558, %v2559
      %v2561 = vsel %vm1783, %v1586, -inf
      %v2562 = vrot.slane %v2561, 4
      %v2563 = vmax.f32 %v2561, %v2562
      %v2564 = vrot.slane %v2563, 2
      %v2565 = vmax.f32 %v2563, %v2564
      %v2566 = vrot.slane %v2565, 1
      %v2567 = vmax.f32 %v2565, %v2566
      %v2568 = vsel %vm1783, %v1594, -inf
      %v2569 = vrot.slane %v2568, 4
      %v2570 = vmax.f32 %v2568, %v2569
      %v2571 = vrot.slane %v2570, 2
      %v2572 = vmax.f32 %v2570, %v2571
      %v2573 = vrot.slane %v2572, 1
      %v2574 = vmax.f32 %v2572, %v2573
      %v2575 = vsel %vm1783, %v1602, -inf
      %v2576 = vrot.slane %v2575, 4
      %v2577 = vmax.f32 %v2575, %v2576
      %v2578 = vrot.slane %v2577, 2
      %v2579 = vmax.f32 %v2577, %v2578
      %v2580 = vrot.slane %v2579, 1
      %v2581 = vmax.f32 %v2579, %v2580
      %v2582 = vsel %vm1783, %v1601, -inf
      %v2583 = vrot.slane %v2582, 4
      %v2584 = vmax.f32 %v2582, %v2583
      %v2585 = vrot.slane %v2584, 2
      %v2586 = vmax.f32 %v2584, %v2585
      %v2587 = vrot.slane %v2586, 1
      %v2588 = vmax.f32 %v2586, %v2587
      %v2589 = vsel %vm1783, %v1603, -inf
      %v2590 = vrot.slane %v2589, 4
      %v2591 = vmax.f32 %v2589, %v2590
      %v2592 = vrot.slane %v2591, 2
      %v2593 = vmax.f32 %v2591, %v2592
      %v2594 = vrot.slane %v2593, 1
      %v2595 = vmax.f32 %v2593, %v2594
      %v2596 = vsel %vm1783, %v1611, -inf
      %v2597 = vrot.slane %v2596, 4
      %v2598 = vmax.f32 %v2596, %v2597
      %v2599 = vrot.slane %v2598, 2
      %v2600 = vmax.f32 %v2598, %v2599
      %v2601 = vrot.slane %v2600, 1
      %v2602 = vmax.f32 %v2600, %v2601
      %v2603 = vsel %vm1783, %v1619, -inf
      %v2604 = vrot.slane %v2603, 4
      %v2605 = vmax.f32 %v2603, %v2604
      %v2606 = vrot.slane %v2605, 2
      %v2607 = vmax.f32 %v2605, %v2606
      %v2608 = vrot.slane %v2607, 1
      %v2609 = vmax.f32 %v2607, %v2608
      %v2610 = vsel %vm1783, %v1618, -inf
      %v2611 = vrot.slane %v2610, 4
      %v2612 = vmax.f32 %v2610, %v2611
      %v2613 = vrot.slane %v2612, 2
      %v2614 = vmax.f32 %v2612, %v2613
      %v2615 = vrot.slane %v2614, 1
      %v2616 = vmax.f32 %v2614, %v2615
      %v2617 = vsel %vm1783, %v1620, -inf
      %v2618 = vrot.slane %v2617, 4
      %v2619 = vmax.f32 %v2617, %v2618
      %v2620 = vrot.slane %v2619, 2
      %v2621 = vmax.f32 %v2619, %v2620
      %v2622 = vrot.slane %v2621, 1
      %v2623 = vmax.f32 %v2621, %v2622
      %v2624 = vsel %vm1783, %v1628, -inf
      %v2625 = vrot.slane %v2624, 4
      %v2626 = vmax.f32 %v2624, %v2625
      %v2627 = vrot.slane %v2626, 2
      %v2628 = vmax.f32 %v2626, %v2627
      %v2629 = vrot.slane %v2628, 1
      %v2630 = vmax.f32 %v2628, %v2629
      %v2631 = vsel %vm1783, %v1636, -inf
      %v2632 = vrot.slane %v2631, 4
      %v2633 = vmax.f32 %v2631, %v2632
      %v2634 = vrot.slane %v2633, 2
      %v2635 = vmax.f32 %v2633, %v2634
      %v2636 = vrot.slane %v2635, 1
      %v2637 = vmax.f32 %v2635, %v2636
      %v2638 = vsel %vm1783, %v1635, -inf
      %v2639 = vrot.slane %v2638, 4
      %v2640 = vmax.f32 %v2638, %v2639
      %v2641 = vrot.slane %v2640, 2
      %v2642 = vmax.f32 %v2640, %v2641
      %v2643 = vrot.slane %v2642, 1
      %v2644 = vmax.f32 %v2642, %v2643
      %v2645 = vsel %vm1783, %v1637, -inf
      %v2646 = vrot.slane %v2645, 4
      %v2647 = vmax.f32 %v2645, %v2646
      %v2648 = vrot.slane %v2647, 2
      %v2649 = vmax.f32 %v2647, %v2648
      %v2650 = vrot.slane %v2649, 1
      %v2651 = vmax.f32 %v2649, %v2650
      %v2652 = vsel %vm1783, %v1645, -inf
      %v2653 = vrot.slane %v2652, 4
      %v2654 = vmax.f32 %v2652, %v2653
      %v2655 = vrot.slane %v2654, 2
      %v2656 = vmax.f32 %v2654, %v2655
      %v2657 = vrot.slane %v2656, 1
      %v2658 = vmax.f32 %v2656, %v2657
      %v2659 = vsel %vm1783, %v1653, -inf
      %v2660 = vrot.slane %v2659, 4
      %v2661 = vmax.f32 %v2659, %v2660
      %v2662 = vrot.slane %v2661, 2
      %v2663 = vmax.f32 %v2661, %v2662
      %v2664 = vrot.slane %v2663, 1
      %v2665 = vmax.f32 %v2663, %v2664
      %v2666 = vsel %vm1783, %v1652, -inf
      %v2667 = vrot.slane %v2666, 4
      %v2668 = vmax.f32 %v2666, %v2667
      %v2669 = vrot.slane %v2668, 2
      %v2670 = vmax.f32 %v2668, %v2669
      %v2671 = vrot.slane %v2670, 1
      %v2672 = vmax.f32 %v2670, %v2671
      %v2673 = vsel %vm1783, %v1654, -inf
      %v2674 = vrot.slane %v2673, 4
      %v2675 = vmax.f32 %v2673, %v2674
      %v2676 = vrot.slane %v2675, 2
      %v2677 = vmax.f32 %v2675, %v2676
      %v2678 = vrot.slane %v2677, 1
      %v2679 = vmax.f32 %v2677, %v2678
      %v2680 = vmax.f32 %v1790, %v1846
      %v2681 = vmax.f32 %v1797, %v1853
      %v2682 = vmax.f32 %v1804, %v1860
      %v2683 = vmax.f32 %v1811, %v1867
      %v2684 = vmax.f32 %v1818, %v1874
      %v2685 = vmax.f32 %v1825, %v1881
      %v2686 = vmax.f32 %v1832, %v1888
      %v2687 = vmax.f32 %v1839, %v1895
      %v2688 = vmax.f32 %v1902, %v1958
      %v2689 = vmax.f32 %v1909, %v1965
      %v2690 = vmax.f32 %v1916, %v1972
      %v2691 = vmax.f32 %v1923, %v1979
      %v2692 = vmax.f32 %v1930, %v1986
      %v2693 = vmax.f32 %v1937, %v1993
      %v2694 = vmax.f32 %v1944, %v2000
      %v2695 = vmax.f32 %v1951, %v2007
      %v2696 = vmax.f32 %v2014, %v2070
      %v2697 = vmax.f32 %v2021, %v2077
      %v2698 = vmax.f32 %v2028, %v2084
      %v2699 = vmax.f32 %v2035, %v2091
      %v2700 = vmax.f32 %v2042, %v2098
      %v2701 = vmax.f32 %v2049, %v2105
      %v2702 = vmax.f32 %v2056, %v2112
      %v2703 = vmax.f32 %v2063, %v2119
      %v2704 = vmax.f32 %v2126, %v2182
      %v2705 = vmax.f32 %v2133, %v2189
      %v2706 = vmax.f32 %v2140, %v2196
      %v2707 = vmax.f32 %v2147, %v2203
      %v2708 = vmax.f32 %v2154, %v2210
      %v2709 = vmax.f32 %v2161, %v2217
      %v2710 = vmax.f32 %v2168, %v2224
      %v2711 = vmax.f32 %v2175, %v2231
      %v2712 = vmax.f32 %v2238, %v2294
      %v2713 = vmax.f32 %v2245, %v2301
      %v2714 = vmax.f32 %v2252, %v2308
      %v2715 = vmax.f32 %v2259, %v2315
      %v2716 = vmax.f32 %v2266, %v2322
      %v2717 = vmax.f32 %v2273, %v2329
      %v2718 = vmax.f32 %v2280, %v2336
      %v2719 = vmax.f32 %v2287, %v2343
      %v2720 = vmax.f32 %v2350, %v2406
      %v2721 = vmax.f32 %v2357, %v2413
      %v2722 = vmax.f32 %v2364, %v2420
      %v2723 = vmax.f32 %v2371, %v2427
      %v2724 = vmax.f32 %v2378, %v2434
      %v2725 = vmax.f32 %v2385, %v2441
      %v2726 = vmax.f32 %v2392, %v2448
      %v2727 = vmax.f32 %v2399, %v2455
      %v2728 = vmax.f32 %v2462, %v2518
      %v2729 = vmax.f32 %v2469, %v2525
      %v2730 = vmax.f32 %v2476, %v2532
      %v2731 = vmax.f32 %v2483, %v2539
      %v2732 = vmax.f32 %v2490, %v2546
      %v2733 = vmax.f32 %v2497, %v2553
      %v2734 = vmax.f32 %v2504, %v2560
      %v2735 = vmax.f32 %v2511, %v2567
      %v2736 = vmax.f32 %v2574, %v2630
      %v2737 = vmax.f32 %v2581, %v2637
      %v2738 = vmax.f32 %v2588, %v2644
      %v2739 = vmax.f32 %v2595, %v2651
      %v2740 = vmax.f32 %v2602, %v2658
      %v2741 = vmax.f32 %v2609, %v2665
      %v2742 = vmax.f32 %v2616, %v2672
      %v2743 = vmax.f32 %v2623, %v2679
      %vm2808 = vcmask 1041409
      %v2809 = vsel %vm2808, %v2681, %v2680
      %vm2810 = vcmask 1042434
      %v2811 = vsel %vm2810, %v2682, %v2809
      %vm2812 = vcmask 1043459
      %v2813 = vsel %vm2812, %v2683, %v2811
      %vm2814 = vcmask 1044484
      %v2815 = vsel %vm2814, %v2684, %v2813
      %vm2816 = vcmask 1045509
      %v2817 = vsel %vm2816, %v2685, %v2815
      %vm2818 = vcmask 1046534
      %v2819 = vsel %vm2818, %v2686, %v2817
      %vm2820 = vcmask 1047559
      %v2821 = vsel %vm2820, %v2687, %v2819
      %v2822 = vsel %vm2808, %v2689, %v2688
      %v2823 = vsel %vm2810, %v2690, %v2822
      %v2824 = vsel %vm2812, %v2691, %v2823
      %v2825 = vsel %vm2814, %v2692, %v2824
      %v2826 = vsel %vm2816, %v2693, %v2825
      %v2827 = vsel %vm2818, %v2694, %v2826
      %v2828 = vsel %vm2820, %v2695, %v2827
      %v2829 = vsel %vm2808, %v2697, %v2696
      %v2830 = vsel %vm2810, %v2698, %v2829
      %v2831 = vsel %vm2812, %v2699, %v2830
      %v2832 = vsel %vm2814, %v2700, %v2831
      %v2833 = vsel %vm2816, %v2701, %v2832
      %v2834 = vsel %vm2818, %v2702, %v2833
      %v2835 = vsel %vm2820, %v2703, %v2834
      %v2836 = vsel %vm2808, %v2705, %v2704
      %v2837 = vsel %vm2810, %v2706, %v2836
      %v2838 = vsel %vm2812, %v2707, %v2837
      %v2839 = vsel %vm2814, %v2708, %v2838
      %v2840 = vsel %vm2816, %v2709, %v2839
      %v2841 = vsel %vm2818, %v2710, %v2840
      %v2842 = vsel %vm2820, %v2711, %v2841
      %v2843 = vsel %vm2808, %v2713, %v2712
      %v2844 = vsel %vm2810, %v2714, %v2843
      %v2845 = vsel %vm2812, %v2715, %v2844
      %v2846 = vsel %vm2814, %v2716, %v2845
      %v2847 = vsel %vm2816, %v2717, %v2846
      %v2848 = vsel %vm2818, %v2718, %v2847
      %v2849 = vsel %vm2820, %v2719, %v2848
      %v2850 = vsel %vm2808, %v2721, %v2720
      %v2851 = vsel %vm2810, %v2722, %v2850
      %v2852 = vsel %vm2812, %v2723, %v2851
      %v2853 = vsel %vm2814, %v2724, %v2852
      %v2854 = vsel %vm2816, %v2725, %v2853
      %v2855 = vsel %vm2818, %v2726, %v2854
      %v2856 = vsel %vm2820, %v2727, %v2855
      %v2857 = vsel %vm2808, %v2729, %v2728
      %v2858 = vsel %vm2810, %v2730, %v2857
      %v2859 = vsel %vm2812, %v2731, %v2858
      %v2860 = vsel %vm2814, %v2732, %v2859
      %v2861 = vsel %vm2816, %v2733, %v2860
      %v2862 = vsel %vm2818, %v2734, %v2861
      %v2863 = vsel %vm2820, %v2735, %v2862
      %v2864 = vsel %vm2808, %v2737, %v2736
      %v2865 = vsel %vm2810, %v2738, %v2864
      %v2866 = vsel %vm2812, %v2739, %v2865
      %v2867 = vsel %vm2814, %v2740, %v2866
      %v2868 = vsel %vm2816, %v2741, %v2867
      %v2869 = vsel %vm2818, %v2742, %v2868
      %v2870 = vsel %vm2820, %v2743, %v2869
      %2879 = vst [vmem:[%s224] sm:$0xff] %v2821
      %2880 = vst [vmem:[%s224 + $0x8] sm:$0xff] %v2828
      %2881 = vst [vmem:[%s224 + $0x10] sm:$0xff] %v2835
      %2882 = vst [vmem:[%s224 + $0x18] sm:$0xff] %v2842
      %2883 = vst [vmem:[%s224 + $0x20] sm:$0xff] %v2849
      %2884 = vst [vmem:[%s224 + $0x28] sm:$0xff] %v2856
      %2885 = vst [vmem:[%s224 + $0x30] sm:$0xff] %v2863
      %2886 = vst [vmem:[%s224 + $0x38] sm:$0xff] %v2870
      %p2887 = scmp.lt.s32.totalorder %s16, 1
      %s2888 = scalar_select %p2887, %s16, 1
      %s2889 = smul.addr %s2888, 8
      %s2890 = smul.addr %s2889, 8
      %s2891 = scalar_lea.vmem %s5, %s2890
      // Predicated region
      $region41: #{simple_cnn_branch_forward.1} parent=39 // pred_check
        %p2892 = pneg %p144
      $region42: #{simple_cnn_branch_forward.1} parent=39 // pred_check_branch
        %2894 = sbr.rel (%p2892) target = $region44
      $region43: #{simple_cnn_branch_forward.1} parent=39 // pred_region
        _
      $region44: #{simple_cnn_branch_forward.1} parent=39 // pred_fallthru
        _
    $region40: #{simple_cnn_branch_forward.1} parent=5 // pred_fallthru
      _
    %p2895 = scmp.le.s32.totalorder 2, %s11
    // Predicated region
    $region45: #{simple_cnn_branch_forward.1} parent=5 // pred_check
      %p2896 = pneg %p2895
    $region46: #{simple_cnn_branch_forward.1} parent=5 // pred_check_branch
      %2898 = sbr.rel (%p2896) target = $region48
    $region47: #{simple_cnn_branch_forward.1} parent=5 // pred_region
      %s2899 = ssub.s32 %s11, 2
      // Predicated region
      $region49: #{simple_cnn_branch_forward.1} parent=47 // pred_check
        %p2900 = pneg %p150
      $region50: #{simple_cnn_branch_forward.1} parent=47 // pred_check_branch
        %2902 = sbr.rel (%p2900) target = $region52
      $region51: #{simple_cnn_branch_forward.1} parent=47 // pred_region
        %p2903 = scmp.lt.s32.totalorder %s17, 1
        %s2904 = scalar_select %p2903, %s17, 1
        %s2905 = smul.addr %s2904, 8
        %s2906 = smul.addr %s2905, 8
        %s2907 = scalar_lea.vmem %s5, %s2906
      $region52: #{simple_cnn_branch_forward.1} parent=47 // pred_fallthru
        _
    $region48: #{simple_cnn_branch_forward.1} parent=5 // pred_fallthru
      _
  $region6: #{simple_cnn_branch_forward.1} parent=0 // loop_footer
    %s15 = sadd.s32 1, %s11
  $region7: #{simple_cnn_branch_forward.1} parent=0 // loop_footer_branch
    %10 = sbr.rel target = $region3
  $region8: #{simple_cnn_branch_forward.1} parent=0 // loop_exit
    _

</llo_original>
